<compile_context>
chip_gen: v6e
topology: v6e:2x2x1
jax: 0.10.0
libtpu: 0.0.40
codegen_flags: <defaults>
</compile_context>

<pallas_src>
import functools

import jax
import jax.numpy as jnp
from jax import lax
from jax.experimental import pallas as pl
from jax.experimental.pallas import tpu as pltpu


# ----------------------------- Pallas kernel ------------------------------ #

def _encoder_bilstm_kernel(*refs, hidden_size, seq_len, batch, num_layers):
    """Whole bidirectional multi-layer LSTM stack in one kernel.

    refs (in order):
      x_ref                      : (T*B, E)   time-major embedded input, bf16
      [wih_l, whh_l, b_l] * L    : (D_l, 8H) bf16, (2H, 8H) bf16, (1, 8H) f32
                                   gate columns [i_f i_b f_f f_b o_f o_b g_f g_b]
      hN_ref                     : (2L, B, H) final hidden (PyTorch dir order)
      cN_ref                     : (2L, B, H) final cell
    """
    H, T, B, L = hidden_size, seq_len, batch, num_layers
    G = 8 * H

    x_ref = refs[0]
    w_refs = refs[1:1 + 3 * L]
    hN_ref = refs[1 + 3 * L]
    cN_ref = refs[2 + 3 * L]

    # Lane masks (built once). Within each 2H gate-type block, the first H
    # lanes belong to the forward direction.
    fwd_lane = (lax.broadcasted_iota(jnp.int32, (B, G), 1) % (2 * H)) < H
    fwd_half = lax.broadcasted_iota(jnp.int32, (B, 2 * H), 1) < H

    seq = x_ref[...]                                   # (T*B, D0) bf16

    for l in range(L):
        wih = w_refs[3 * l][...]                       # (D_l, 8H) bf16
        whh = w_refs[3 * l + 1][...]                   # (2H, 8H) bf16 (block-diag)
        bias = w_refs[3 * l + 2][...]                  # (1, 8H)  f32

        # Input projection for ALL timesteps & BOTH directions: one MXU matmul.
        gx = jnp.dot(seq, wih, preferred_element_type=jnp.float32) + bias

        # Hoisted fwd/bwd gate mux: forward lanes read x(t), backward lanes
        # read x(T-1-t).  All indexing static; outside the serial h-chain.
        gx_sel = [jnp.where(fwd_lane,
                            gx[t * B:(t + 1) * B, :],
                            gx[(T - 1 - t) * B:(T - t) * B, :])
                  for t in range(T)]

        # Recurrent carry, both directions packed on lanes: [:, :H]=fwd.
        h = jnp.zeros((B, 2 * H), jnp.float32)
        c = jnp.zeros((B, 2 * H), jnp.float32)
        h_hist = [None] * T

        # Fully unrolled recurrence (T static & small).
        for t in range(T):
            gates = gx_sel[t] + jnp.dot(h.astype(jnp.bfloat16), whh,
                                        preferred_element_type=jnp.float32)

            sg = jax.nn.sigmoid(gates)                 # all 8H lanes (EUP is free)
            g_all = jnp.tanh(gates[:, 6 * H:])         # [g_f | g_b]
            i_all = sg[:, 0:2 * H]
            f_all = sg[:, 2 * H:4 * H]
            o_all = sg[:, 4 * H:6 * H]

            c = f_all * c + i_all * g_all              # (B, 2H) f32
            h = o_all * jnp.tanh(c)
            h_hist[t] = h                              # fwd@t on lanes :H, bwd@(T-1-t) on lanes H:

        # Final states (PyTorch ordering: [fwd_l, bwd_l] stacked over layers).
        hN_ref[2 * l] = h[:, 0:H]
        hN_ref[2 * l + 1] = h[:, H:2 * H]
        cN_ref[2 * l] = c[:, 0:H]
        cN_ref[2 * l + 1] = c[:, H:2 * H]

        # Next layer's input sequence stays resident (never touches HBM).
        # Row for timestep t = [h_fwd(t) | h_bwd(t)] = mux of iterations t and T-1-t.
        if l + 1 < L:
            rows = [jnp.where(fwd_half, h_hist[t], h_hist[T - 1 - t])
                    for t in range(T)]
            seq = jnp.concatenate(rows, axis=0).astype(jnp.bfloat16)  # (T*B, 2H)


# ------------------------ parameter fusion (init-time) --------------------- #

def _fuse_direction_params(pf, pb, H):
    """Pack both directions' PyTorch-shaped LSTM weights into the fused layout.

    Returns (wih (D,8H) bf16, whh (2H,8H) bf16, bias (1,8H) f32) with gate
    column order [i_f i_b f_f f_b o_f o_b g_f g_b] (PyTorch rows are [i,f,g,o]).
    """
    def gsplit(w):
        return w[0:H], w[H:2 * H], w[2 * H:3 * H], w[3 * H:4 * H]

    i_f, f_f, g_f, o_f = gsplit(pf["wih"])
    i_b, f_b, g_b, o_b = gsplit(pb["wih"])
    wih_fused = jnp.concatenate(
        [i_f, i_b, f_f, f_b, o_f, o_b, g_f, g_b], axis=0).T          # (D, 8H)

    bi_f, bf_f, bg_f, bo_f = gsplit(pf["bih"] + pf["bhh"])
    bi_b, bf_b, bg_b, bo_b = gsplit(pb["bih"] + pb["bhh"])
    bias = jnp.concatenate(
        [bi_f, bi_b, bf_f, bf_b, bo_f, bo_b, bg_f, bg_b]).reshape(1, 8 * H)

    hi_f, hf_f, hg_f, ho_f = gsplit(pf["whh"])
    hi_b, hf_b, hg_b, ho_b = gsplit(pb["whh"])
    Z = jnp.zeros((H, H), jnp.float32)
    top = jnp.concatenate([hi_f.T, Z, hf_f.T, Z, ho_f.T, Z, hg_f.T, Z], axis=1)
    bot = jnp.concatenate([Z, hi_b.T, Z, hf_b.T, Z, ho_b.T, Z, hg_b.T], axis=1)
    whh_fused = jnp.concatenate([top, bot], axis=0)                  # (2H, 8H)

    return (wih_fused.astype(jnp.bfloat16),
            whh_fused.astype(jnp.bfloat16),
            bias.astype(jnp.float32))


def pack_encoder_params(params, hidden_size):
    """One-time packing of raw (PyTorch-shaped) params into the kernel layout."""
    packed = {
        "embedding": params["embedding"].astype(jnp.bfloat16),
        "layers": [],
    }
    for layer_p in params["layers"]:
        wih, whh, bias = _fuse_direction_params(layer_p["fwd"], layer_p["bwd"],
                                                hidden_size)
        packed["layers"].append({"wih": wih, "whh": whh, "bias": bias})
    return packed


# ------------------------- Encoder (wrapper glue) -------------------------- #

def init_encoder_params(key, input_size, embedding_size, hidden_size,
                        num_layers):
    """Deterministic raw parameters matching the PyTorch module's shapes."""
    ks = jax.random.split(key, 1 + num_layers * 2 * 4)
    kit = iter(ks)
    params = {
        "embedding": 0.1 * jax.random.normal(
            next(kit), (input_size, embedding_size), jnp.float32),
        "layers": [],
    }
    for layer in range(num_layers):
        in_dim = embedding_size if layer == 0 else 2 * hidden_size
        layer_p = {}
        for direction in ("fwd", "bwd"):
            layer_p[direction] = {
                "wih": 0.1 * jax.random.normal(
                    next(kit), (4 * hidden_size, in_dim), jnp.float32),
                "whh": 0.1 * jax.random.normal(
                    next(kit), (4 * hidden_size, hidden_size), jnp.float32),
                "bih": 0.1 * jax.random.normal(
                    next(kit), (4 * hidden_size,), jnp.float32),
                "bhh": 0.1 * jax.random.normal(
                    next(kit), (4 * hidden_size,), jnp.float32),
            }
        params["layers"].append(layer_p)
    return params


def encoder_forward(packed_params, x, num_layers, hidden_size):
    """Mirrors Encoder.forward: returns (hidden, cell), each
    (num_layers*2, batch, hidden_size), PyTorch direction ordering."""
    B, T = x.shape
    H, L = hidden_size, num_layers
    E = packed_params["embedding"].shape[1]

    # Embedding gather + time-major flatten, all in bf16 (wrapper glue).
    emb = jnp.take(packed_params["embedding"], x, axis=0)        # (B, T, E) bf16
    x2d = jnp.transpose(emb, (1, 0, 2)).reshape(T * B, E)        # (T*B, E) bf16

    weight_args = []
    for lp in packed_params["layers"]:
        weight_args += [lp["wih"], lp["whh"], lp["bias"]]

    kernel = functools.partial(_encoder_bilstm_kernel, hidden_size=H,
                               seq_len=T, batch=B, num_layers=L)

    # Advisory cost hint for XLA's scheduler.
    flops, trans = 0, 0
    bytes_accessed = x2d.size * x2d.dtype.itemsize
    for l in range(L):
        d_in = E if l == 0 else 2 * H
        flops += 2 * T * B * d_in * 8 * H       # hoisted input projection
        flops += 2 * T * B * 2 * H * 8 * H      # recurrent matmuls
        trans += T * B * (8 * H + 2 * H + 2 * H)
    for w in weight_args:
        bytes_accessed += w.size * w.dtype.itemsize
    bytes_accessed += 2 * (2 * L * B * H) * 4

    hidden, cell = pl.pallas_call(
        kernel,
        out_shape=(
            jax.ShapeDtypeStruct((2 * L, B, H), jnp.float32),
            jax.ShapeDtypeStruct((2 * L, B, H), jnp.float32),
        ),
        in_specs=[pl.BlockSpec(memory_space=pltpu.MemorySpace.VMEM)] * (1 + 3 * L),
        out_specs=(
            pl.BlockSpec(memory_space=pltpu.MemorySpace.VMEM),
            pl.BlockSpec(memory_space=pltpu.MemorySpace.VMEM),
        ),
        compiler_params=pltpu.CompilerParams(
            vmem_limit_bytes=32 * 1024 * 1024),
        cost_estimate=pl.CostEstimate(flops=flops, transcendentals=trans,
                                      bytes_accessed=bytes_accessed),
    )(x2d, *weight_args)
    return hidden, cell


# --------------------------- pure-JAX reference ---------------------------- #

def _lstm_dir_ref(x_seq, wih, whh, bih, bhh):
    T, B, _ = x_seq.shape
    H = whh.shape[1]
    h = jnp.zeros((B, H), jnp.float32)
    c = jnp.zeros((B, H), jnp.float32)
    bias = bih + bhh
    outs = []
    for t in range(T):
        gates = x_seq[t] @ wih.T + h @ whh.T + bias
        i = jax.nn.sigmoid(gates[:, 0 * H:1 * H])
        f = jax.nn.sigmoid(gates[:, 1 * H:2 * H])
        g = jnp.tanh(gates[:, 2 * H:3 * H])
        o = jax.nn.sigmoid(gates[:, 3 * H:4 * H])
        c = f * c + i * g
        h = o * jnp.tanh(c)
        outs.append(h)
    return jnp.stack(outs, axis=0), h, c


def encoder_forward_ref(params, x, num_layers, hidden_size):
    emb = jnp.take(params["embedding"], x, axis=0)
    seq = jnp.transpose(emb, (1, 0, 2))
    hiddens, cells = [], []
    for layer in range(num_layers):
        pf = params["layers"][layer]["fwd"]
        pb = params["layers"][layer]["bwd"]
        out_f, h_f, c_f = _lstm_dir_ref(
            seq, pf["wih"], pf["whh"], pf["bih"], pf["bhh"])
        out_b, h_b, c_b = _lstm_dir_ref(
            seq[::-1], pb["wih"], pb["whh"], pb["bih"], pb["bhh"])
        out_b = out_b[::-1]
        seq = jnp.concatenate([out_f, out_b], axis=-1)
        hiddens += [h_f, h_b]
        cells += [c_f, c_b]
    return jnp.stack(hiddens, axis=0), jnp.stack(cells, axis=0)


# ----------------------------------- main ---------------------------------- #

if __name__ == "__main__":
    input_size = 16      # vocab size (nn.Embedding rows)
    embedding_size = 32
    hidden_size = 32
    num_layers = 2
    batch = 2
    seq_len = 8

    key = jax.random.PRNGKey(0)
    k_params, k_x = jax.random.split(key)
    params = init_encoder_params(k_params, input_size, embedding_size,
                                 hidden_size, num_layers)
    packed = pack_encoder_params(params, hidden_size)   # one-time, at init

    # integer token ids (B, T), as expected by nn.Embedding
    x = jax.random.randint(k_x, (batch, seq_len), 0, input_size,
                           dtype=jnp.int32)

    enc = jax.jit(functools.partial(encoder_forward,
                                    num_layers=num_layers,
                                    hidden_size=hidden_size))
    hidden, cell = enc(packed, x)
    hidden = jax.block_until_ready(hidden)
    cell = jax.block_until_ready(cell)

    assert hidden.shape == (num_layers * 2, batch, hidden_size)
    assert cell.shape == (num_layers * 2, batch, hidden_size)

    # numerical check against a pure-JAX f32 reference (bf16 MXU operands &
    # bf16 embedding in the kernel path -> slightly loose tolerance)
    hidden_ref, cell_ref = encoder_forward_ref(params, x, num_layers,
                                               hidden_size)
    assert jnp.allclose(hidden, hidden_ref, atol=2e-2, rtol=2e-2)
    assert jnp.allclose(cell, cell_ref, atol=2e-2, rtol=2e-2)

    print("KERNEL_OK")
</pallas_src>

<mosaic_0001>
module attributes {stable_mosaic.version = 11 : i64} {
  func.func @_encoder_bilstm_kernel(%arg0: memref<16x32xbf16, #tpu.memory_space<vmem>>, %arg1: memref<32x256xbf16, #tpu.memory_space<vmem>>, %arg2: memref<64x256xbf16, #tpu.memory_space<vmem>>, %arg3: memref<1x256xf32, #tpu.memory_space<vmem>>, %arg4: memref<64x256xbf16, #tpu.memory_space<vmem>>, %arg5: memref<64x256xbf16, #tpu.memory_space<vmem>>, %arg6: memref<1x256xf32, #tpu.memory_space<vmem>>, %arg7: memref<4x2x32xf32, #tpu.memory_space<vmem>>, %arg8: memref<4x2x32xf32, #tpu.memory_space<vmem>>) attributes {dimension_semantics = [], scalar_prefetch = 0 : i64, scratch_operands = 0 : i64, tpu.core_type = #tpu.core_type<tc>} {
    %0 = tpu.iota {dimensions = array<i32: 1>} : vector<2x256xi32>
    %c64_i32 = arith.constant 64 : i32
    %c0_i32 = arith.constant 0 : i32
    %1 = arith.cmpi eq, %c64_i32, %c0_i32 : i32
    %c1_i32 = arith.constant 1 : i32
    %2 = arith.select %1, %c1_i32, %c64_i32 : i32
    %3 = vector.broadcast %2 : i32 to vector<2x256xi32>
    %4 = arith.remsi %0, %3 : vector<2x256xi32>
    %c0_i32_0 = arith.constant 0 : i32
    %5 = vector.broadcast %c0_i32_0 : i32 to vector<2x256xi32>
    %6 = arith.cmpi ne, %4, %5 : vector<2x256xi32>
    %c0_i32_1 = arith.constant 0 : i32
    %7 = vector.broadcast %c0_i32_1 : i32 to vector<2x256xi32>
    %8 = arith.cmpi slt, %4, %7 : vector<2x256xi32>
    %c0_i32_2 = arith.constant 0 : i32
    %9 = arith.cmpi slt, %2, %c0_i32_2 : i32
    %10 = vector.broadcast %9 : i1 to vector<2x256xi1>
    %11 = vector.broadcast %10 : vector<2x256xi1> to vector<2x256xi1>
    %12 = arith.xori %8, %11 : vector<2x256xi1>
    %13 = arith.andi %12, %6 : vector<2x256xi1>
    %14 = vector.broadcast %2 : i32 to vector<2x256xi32>
    %15 = arith.addi %4, %14 : vector<2x256xi32>
    %16 = arith.select %13, %15, %4 : vector<2x256xi1>, vector<2x256xi32>
    %c32_i32 = arith.constant 32 : i32
    %17 = vector.broadcast %c32_i32 : i32 to vector<2x256xi32>
    %18 = arith.cmpi slt, %16, %17 : vector<2x256xi32>
    %19 = tpu.iota {dimensions = array<i32: 1>} : vector<2x64xi32>
    %c32_i32_3 = arith.constant 32 : i32
    %20 = vector.broadcast %c32_i32_3 : i32 to vector<2x64xi32>
    %21 = arith.cmpi slt, %19, %20 : vector<2x64xi32>
    %c0 = arith.constant 0 : index
    %c0_4 = arith.constant 0 : index
    %22 = vector.load %arg0[%c0, %c0_4] : memref<16x32xbf16, #tpu.memory_space<vmem>>, vector<16x32xbf16>
    %c0_5 = arith.constant 0 : index
    %c0_6 = arith.constant 0 : index
    %23 = vector.load %arg1[%c0_5, %c0_6] : memref<32x256xbf16, #tpu.memory_space<vmem>>, vector<32x256xbf16>
    %c0_7 = arith.constant 0 : index
    %c0_8 = arith.constant 0 : index
    %24 = vector.load %arg2[%c0_7, %c0_8] : memref<64x256xbf16, #tpu.memory_space<vmem>>, vector<64x256xbf16>
    %c0_9 = arith.constant 0 : index
    %c0_10 = arith.constant 0 : index
    %25 = vector.load %arg3[%c0_9, %c0_10] : memref<1x256xf32, #tpu.memory_space<vmem>>, vector<1x256xf32>
    %cst = arith.constant dense<0.000000e+00> : vector<16x256xf32>
    %26 = tpu.matmul %22, %23, %cst {dimension_numbers = #tpu.dot_dimension_numbers<[1], [0], [0], [1], [0, 0, 1, 1], [], []>} : vector<16x32xbf16>, vector<32x256xbf16>, vector<16x256xf32> -> vector<16x256xf32>
    %27 = vector.broadcast %25 : vector<1x256xf32> to vector<16x256xf32>
    %28 = arith.addf %26, %27 : vector<16x256xf32>
    %29 = vector.extract_strided_slice %28 {offsets = [0, 0], sizes = [2, 256], strides = [1, 1]} : vector<16x256xf32> to vector<2x256xf32>
    %30 = vector.extract_strided_slice %28 {offsets = [14, 0], sizes = [2, 256], strides = [1, 1]} : vector<16x256xf32> to vector<2x256xf32>
    %31 = arith.select %18, %29, %30 : vector<2x256xi1>, vector<2x256xf32>
    %32 = vector.extract_strided_slice %28 {offsets = [2, 0], sizes = [2, 256], strides = [1, 1]} : vector<16x256xf32> to vector<2x256xf32>
    %33 = vector.extract_strided_slice %28 {offsets = [12, 0], sizes = [2, 256], strides = [1, 1]} : vector<16x256xf32> to vector<2x256xf32>
    %34 = arith.select %18, %32, %33 : vector<2x256xi1>, vector<2x256xf32>
    %35 = vector.extract_strided_slice %28 {offsets = [4, 0], sizes = [2, 256], strides = [1, 1]} : vector<16x256xf32> to vector<2x256xf32>
    %36 = vector.extract_strided_slice %28 {offsets = [10, 0], sizes = [2, 256], strides = [1, 1]} : vector<16x256xf32> to vector<2x256xf32>
    %37 = arith.select %18, %35, %36 : vector<2x256xi1>, vector<2x256xf32>
    %38 = vector.extract_strided_slice %28 {offsets = [6, 0], sizes = [2, 256], strides = [1, 1]} : vector<16x256xf32> to vector<2x256xf32>
    %39 = vector.extract_strided_slice %28 {offsets = [8, 0], sizes = [2, 256], strides = [1, 1]} : vector<16x256xf32> to vector<2x256xf32>
    %40 = arith.select %18, %38, %39 : vector<2x256xi1>, vector<2x256xf32>
    %41 = vector.extract_strided_slice %28 {offsets = [8, 0], sizes = [2, 256], strides = [1, 1]} : vector<16x256xf32> to vector<2x256xf32>
    %42 = vector.extract_strided_slice %28 {offsets = [6, 0], sizes = [2, 256], strides = [1, 1]} : vector<16x256xf32> to vector<2x256xf32>
    %43 = arith.select %18, %41, %42 : vector<2x256xi1>, vector<2x256xf32>
    %44 = vector.extract_strided_slice %28 {offsets = [10, 0], sizes = [2, 256], strides = [1, 1]} : vector<16x256xf32> to vector<2x256xf32>
    %45 = vector.extract_strided_slice %28 {offsets = [4, 0], sizes = [2, 256], strides = [1, 1]} : vector<16x256xf32> to vector<2x256xf32>
    %46 = arith.select %18, %44, %45 : vector<2x256xi1>, vector<2x256xf32>
    %47 = vector.extract_strided_slice %28 {offsets = [12, 0], sizes = [2, 256], strides = [1, 1]} : vector<16x256xf32> to vector<2x256xf32>
    %48 = vector.extract_strided_slice %28 {offsets = [2, 0], sizes = [2, 256], strides = [1, 1]} : vector<16x256xf32> to vector<2x256xf32>
    %49 = arith.select %18, %47, %48 : vector<2x256xi1>, vector<2x256xf32>
    %50 = vector.extract_strided_slice %28 {offsets = [14, 0], sizes = [2, 256], strides = [1, 1]} : vector<16x256xf32> to vector<2x256xf32>
    %51 = vector.extract_strided_slice %28 {offsets = [0, 0], sizes = [2, 256], strides = [1, 1]} : vector<16x256xf32> to vector<2x256xf32>
    %52 = arith.select %18, %50, %51 : vector<2x256xi1>, vector<2x256xf32>
    %cst_11 = arith.constant 0.000000e+00 : f32
    %53 = vector.broadcast %cst_11 : f32 to vector<2x64xf32>
    %cst_12 = arith.constant 0.000000e+00 : f32
    %54 = vector.broadcast %cst_12 : f32 to vector<2x64xf32>
    %55 = arith.truncf %53 : vector<2x64xf32> to vector<2x64xbf16>
    %cst_13 = arith.constant dense<0.000000e+00> : vector<2x256xf32>
    %56 = tpu.matmul %55, %24, %cst_13 {dimension_numbers = #tpu.dot_dimension_numbers<[1], [0], [0], [1], [0, 0, 1, 1], [], []>} : vector<2x64xbf16>, vector<64x256xbf16>, vector<2x256xf32> -> vector<2x256xf32>
    %57 = arith.addf %31, %56 : vector<2x256xf32>
    %58 = arith.negf %57 : vector<2x256xf32>
    %59 = math.exp %58 : vector<2x256xf32>
    %cst_14 = arith.constant 1.000000e+00 : f32
    %60 = vector.broadcast %cst_14 : f32 to vector<2x256xf32>
    %61 = arith.addf %60, %59 : vector<2x256xf32>
    %62 = arith.divf %60, %61 : vector<2x256xf32>
    %63 = vector.extract_strided_slice %57 {offsets = [0, 192], sizes = [2, 64], strides = [1, 1]} : vector<2x256xf32> to vector<2x64xf32>
    %64 = math.tanh %63 : vector<2x64xf32>
    %65 = vector.extract_strided_slice %62 {offsets = [0, 0], sizes = [2, 64], strides = [1, 1]} : vector<2x256xf32> to vector<2x64xf32>
    %66 = vector.extract_strided_slice %62 {offsets = [0, 64], sizes = [2, 64], strides = [1, 1]} : vector<2x256xf32> to vector<2x64xf32>
    %67 = vector.extract_strided_slice %62 {offsets = [0, 128], sizes = [2, 64], strides = [1, 1]} : vector<2x256xf32> to vector<2x64xf32>
    %68 = arith.mulf %66, %54 : vector<2x64xf32>
    %69 = arith.mulf %65, %64 : vector<2x64xf32>
    %70 = arith.addf %68, %69 : vector<2x64xf32>
    %71 = math.tanh %70 : vector<2x64xf32>
    %72 = arith.mulf %67, %71 : vector<2x64xf32>
    %73 = arith.truncf %72 : vector<2x64xf32> to vector<2x64xbf16>
    %cst_15 = arith.constant dense<0.000000e+00> : vector<2x256xf32>
    %74 = tpu.matmul %73, %24, %cst_15 {dimension_numbers = #tpu.dot_dimension_numbers<[1], [0], [0], [1], [0, 0, 1, 1], [], []>} : vector<2x64xbf16>, vector<64x256xbf16>, vector<2x256xf32> -> vector<2x256xf32>
    %75 = arith.addf %34, %74 : vector<2x256xf32>
    %76 = arith.negf %75 : vector<2x256xf32>
    %77 = math.exp %76 : vector<2x256xf32>
    %cst_16 = arith.constant 1.000000e+00 : f32
    %78 = vector.broadcast %cst_16 : f32 to vector<2x256xf32>
    %79 = arith.addf %78, %77 : vector<2x256xf32>
    %80 = arith.divf %78, %79 : vector<2x256xf32>
    %81 = vector.extract_strided_slice %75 {offsets = [0, 192], sizes = [2, 64], strides = [1, 1]} : vector<2x256xf32> to vector<2x64xf32>
    %82 = math.tanh %81 : vector<2x64xf32>
    %83 = vector.extract_strided_slice %80 {offsets = [0, 0], sizes = [2, 64], strides = [1, 1]} : vector<2x256xf32> to vector<2x64xf32>
    %84 = vector.extract_strided_slice %80 {offsets = [0, 64], sizes = [2, 64], strides = [1, 1]} : vector<2x256xf32> to vector<2x64xf32>
    %85 = vector.extract_strided_slice %80 {offsets = [0, 128], sizes = [2, 64], strides = [1, 1]} : vector<2x256xf32> to vector<2x64xf32>
    %86 = arith.mulf %84, %70 : vector<2x64xf32>
    %87 = arith.mulf %83, %82 : vector<2x64xf32>
    %88 = arith.addf %86, %87 : vector<2x64xf32>
    %89 = math.tanh %88 : vector<2x64xf32>
    %90 = arith.mulf %85, %89 : vector<2x64xf32>
    %91 = arith.truncf %90 : vector<2x64xf32> to vector<2x64xbf16>
    %cst_17 = arith.constant dense<0.000000e+00> : vector<2x256xf32>
    %92 = tpu.matmul %91, %24, %cst_17 {dimension_numbers = #tpu.dot_dimension_numbers<[1], [0], [0], [1], [0, 0, 1, 1], [], []>} : vector<2x64xbf16>, vector<64x256xbf16>, vector<2x256xf32> -> vector<2x256xf32>
    %93 = arith.addf %37, %92 : vector<2x256xf32>
    %94 = arith.negf %93 : vector<2x256xf32>
    %95 = math.exp %94 : vector<2x256xf32>
    %cst_18 = arith.constant 1.000000e+00 : f32
    %96 = vector.broadcast %cst_18 : f32 to vector<2x256xf32>
    %97 = arith.addf %96, %95 : vector<2x256xf32>
    %98 = arith.divf %96, %97 : vector<2x256xf32>
    %99 = vector.extract_strided_slice %93 {offsets = [0, 192], sizes = [2, 64], strides = [1, 1]} : vector<2x256xf32> to vector<2x64xf32>
    %100 = math.tanh %99 : vector<2x64xf32>
    %101 = vector.extract_strided_slice %98 {offsets = [0, 0], sizes = [2, 64], strides = [1, 1]} : vector<2x256xf32> to vector<2x64xf32>
    %102 = vector.extract_strided_slice %98 {offsets = [0, 64], sizes = [2, 64], strides = [1, 1]} : vector<2x256xf32> to vector<2x64xf32>
    %103 = vector.extract_strided_slice %98 {offsets = [0, 128], sizes = [2, 64], strides = [1, 1]} : vector<2x256xf32> to vector<2x64xf32>
    %104 = arith.mulf %102, %88 : vector<2x64xf32>
    %105 = arith.mulf %101, %100 : vector<2x64xf32>
    %106 = arith.addf %104, %105 : vector<2x64xf32>
    %107 = math.tanh %106 : vector<2x64xf32>
    %108 = arith.mulf %103, %107 : vector<2x64xf32>
    %109 = arith.truncf %108 : vector<2x64xf32> to vector<2x64xbf16>
    %cst_19 = arith.constant dense<0.000000e+00> : vector<2x256xf32>
    %110 = tpu.matmul %109, %24, %cst_19 {dimension_numbers = #tpu.dot_dimension_numbers<[1], [0], [0], [1], [0, 0, 1, 1], [], []>} : vector<2x64xbf16>, vector<64x256xbf16>, vector<2x256xf32> -> vector<2x256xf32>
    %111 = arith.addf %40, %110 : vector<2x256xf32>
    %112 = arith.negf %111 : vector<2x256xf32>
    %113 = math.exp %112 : vector<2x256xf32>
    %cst_20 = arith.constant 1.000000e+00 : f32
    %114 = vector.broadcast %cst_20 : f32 to vector<2x256xf32>
    %115 = arith.addf %114, %113 : vector<2x256xf32>
    %116 = arith.divf %114, %115 : vector<2x256xf32>
    %117 = vector.extract_strided_slice %111 {offsets = [0, 192], sizes = [2, 64], strides = [1, 1]} : vector<2x256xf32> to vector<2x64xf32>
    %118 = math.tanh %117 : vector<2x64xf32>
    %119 = vector.extract_strided_slice %116 {offsets = [0, 0], sizes = [2, 64], strides = [1, 1]} : vector<2x256xf32> to vector<2x64xf32>
    %120 = vector.extract_strided_slice %116 {offsets = [0, 64], sizes = [2, 64], strides = [1, 1]} : vector<2x256xf32> to vector<2x64xf32>
    %121 = vector.extract_strided_slice %116 {offsets = [0, 128], sizes = [2, 64], strides = [1, 1]} : vector<2x256xf32> to vector<2x64xf32>
    %122 = arith.mulf %120, %106 : vector<2x64xf32>
    %123 = arith.mulf %119, %118 : vector<2x64xf32>
    %124 = arith.addf %122, %123 : vector<2x64xf32>
    %125 = math.tanh %124 : vector<2x64xf32>
    %126 = arith.mulf %121, %125 : vector<2x64xf32>
    %127 = arith.truncf %126 : vector<2x64xf32> to vector<2x64xbf16>
    %cst_21 = arith.constant dense<0.000000e+00> : vector<2x256xf32>
    %128 = tpu.matmul %127, %24, %cst_21 {dimension_numbers = #tpu.dot_dimension_numbers<[1], [0], [0], [1], [0, 0, 1, 1], [], []>} : vector<2x64xbf16>, vector<64x256xbf16>, vector<2x256xf32> -> vector<2x256xf32>
    %129 = arith.addf %43, %128 : vector<2x256xf32>
    %130 = arith.negf %129 : vector<2x256xf32>
    %131 = math.exp %130 : vector<2x256xf32>
    %cst_22 = arith.constant 1.000000e+00 : f32
    %132 = vector.broadcast %cst_22 : f32 to vector<2x256xf32>
    %133 = arith.addf %132, %131 : vector<2x256xf32>
    %134 = arith.divf %132, %133 : vector<2x256xf32>
    %135 = vector.extract_strided_slice %129 {offsets = [0, 192], sizes = [2, 64], strides = [1, 1]} : vector<2x256xf32> to vector<2x64xf32>
    %136 = math.tanh %135 : vector<2x64xf32>
    %137 = vector.extract_strided_slice %134 {offsets = [0, 0], sizes = [2, 64], strides = [1, 1]} : vector<2x256xf32> to vector<2x64xf32>
    %138 = vector.extract_strided_slice %134 {offsets = [0, 64], sizes = [2, 64], strides = [1, 1]} : vector<2x256xf32> to vector<2x64xf32>
    %139 = vector.extract_strided_slice %134 {offsets = [0, 128], sizes = [2, 64], strides = [1, 1]} : vector<2x256xf32> to vector<2x64xf32>
    %140 = arith.mulf %138, %124 : vector<2x64xf32>
    %141 = arith.mulf %137, %136 : vector<2x64xf32>
    %142 = arith.addf %140, %141 : vector<2x64xf32>
    %143 = math.tanh %142 : vector<2x64xf32>
    %144 = arith.mulf %139, %143 : vector<2x64xf32>
    %145 = arith.truncf %144 : vector<2x64xf32> to vector<2x64xbf16>
    %cst_23 = arith.constant dense<0.000000e+00> : vector<2x256xf32>
    %146 = tpu.matmul %145, %24, %cst_23 {dimension_numbers = #tpu.dot_dimension_numbers<[1], [0], [0], [1], [0, 0, 1, 1], [], []>} : vector<2x64xbf16>, vector<64x256xbf16>, vector<2x256xf32> -> vector<2x256xf32>
    %147 = arith.addf %46, %146 : vector<2x256xf32>
    %148 = arith.negf %147 : vector<2x256xf32>
    %149 = math.exp %148 : vector<2x256xf32>
    %cst_24 = arith.constant 1.000000e+00 : f32
    %150 = vector.broadcast %cst_24 : f32 to vector<2x256xf32>
    %151 = arith.addf %150, %149 : vector<2x256xf32>
    %152 = arith.divf %150, %151 : vector<2x256xf32>
    %153 = vector.extract_strided_slice %147 {offsets = [0, 192], sizes = [2, 64], strides = [1, 1]} : vector<2x256xf32> to vector<2x64xf32>
    %154 = math.tanh %153 : vector<2x64xf32>
    %155 = vector.extract_strided_slice %152 {offsets = [0, 0], sizes = [2, 64], strides = [1, 1]} : vector<2x256xf32> to vector<2x64xf32>
    %156 = vector.extract_strided_slice %152 {offsets = [0, 64], sizes = [2, 64], strides = [1, 1]} : vector<2x256xf32> to vector<2x64xf32>
    %157 = vector.extract_strided_slice %152 {offsets = [0, 128], sizes = [2, 64], strides = [1, 1]} : vector<2x256xf32> to vector<2x64xf32>
    %158 = arith.mulf %156, %142 : vector<2x64xf32>
    %159 = arith.mulf %155, %154 : vector<2x64xf32>
    %160 = arith.addf %158, %159 : vector<2x64xf32>
    %161 = math.tanh %160 : vector<2x64xf32>
    %162 = arith.mulf %157, %161 : vector<2x64xf32>
    %163 = arith.truncf %162 : vector<2x64xf32> to vector<2x64xbf16>
    %cst_25 = arith.constant dense<0.000000e+00> : vector<2x256xf32>
    %164 = tpu.matmul %163, %24, %cst_25 {dimension_numbers = #tpu.dot_dimension_numbers<[1], [0], [0], [1], [0, 0, 1, 1], [], []>} : vector<2x64xbf16>, vector<64x256xbf16>, vector<2x256xf32> -> vector<2x256xf32>
    %165 = arith.addf %49, %164 : vector<2x256xf32>
    %166 = arith.negf %165 : vector<2x256xf32>
    %167 = math.exp %166 : vector<2x256xf32>
    %cst_26 = arith.constant 1.000000e+00 : f32
    %168 = vector.broadcast %cst_26 : f32 to vector<2x256xf32>
    %169 = arith.addf %168, %167 : vector<2x256xf32>
    %170 = arith.divf %168, %169 : vector<2x256xf32>
    %171 = vector.extract_strided_slice %165 {offsets = [0, 192], sizes = [2, 64], strides = [1, 1]} : vector<2x256xf32> to vector<2x64xf32>
    %172 = math.tanh %171 : vector<2x64xf32>
    %173 = vector.extract_strided_slice %170 {offsets = [0, 0], sizes = [2, 64], strides = [1, 1]} : vector<2x256xf32> to vector<2x64xf32>
    %174 = vector.extract_strided_slice %170 {offsets = [0, 64], sizes = [2, 64], strides = [1, 1]} : vector<2x256xf32> to vector<2x64xf32>
    %175 = vector.extract_strided_slice %170 {offsets = [0, 128], sizes = [2, 64], strides = [1, 1]} : vector<2x256xf32> to vector<2x64xf32>
    %176 = arith.mulf %174, %160 : vector<2x64xf32>
    %177 = arith.mulf %173, %172 : vector<2x64xf32>
    %178 = arith.addf %176, %177 : vector<2x64xf32>
    %179 = math.tanh %178 : vector<2x64xf32>
    %180 = arith.mulf %175, %179 : vector<2x64xf32>
    %181 = arith.truncf %180 : vector<2x64xf32> to vector<2x64xbf16>
    %cst_27 = arith.constant dense<0.000000e+00> : vector<2x256xf32>
    %182 = tpu.matmul %181, %24, %cst_27 {dimension_numbers = #tpu.dot_dimension_numbers<[1], [0], [0], [1], [0, 0, 1, 1], [], []>} : vector<2x64xbf16>, vector<64x256xbf16>, vector<2x256xf32> -> vector<2x256xf32>
    %183 = arith.addf %52, %182 : vector<2x256xf32>
    %184 = arith.negf %183 : vector<2x256xf32>
    %185 = math.exp %184 : vector<2x256xf32>
    %cst_28 = arith.constant 1.000000e+00 : f32
    %186 = vector.broadcast %cst_28 : f32 to vector<2x256xf32>
    %187 = arith.addf %186, %185 : vector<2x256xf32>
    %188 = arith.divf %186, %187 : vector<2x256xf32>
    %189 = vector.extract_strided_slice %183 {offsets = [0, 192], sizes = [2, 64], strides = [1, 1]} : vector<2x256xf32> to vector<2x64xf32>
    %190 = math.tanh %189 : vector<2x64xf32>
    %191 = vector.extract_strided_slice %188 {offsets = [0, 0], sizes = [2, 64], strides = [1, 1]} : vector<2x256xf32> to vector<2x64xf32>
    %192 = vector.extract_strided_slice %188 {offsets = [0, 64], sizes = [2, 64], strides = [1, 1]} : vector<2x256xf32> to vector<2x64xf32>
    %193 = vector.extract_strided_slice %188 {offsets = [0, 128], sizes = [2, 64], strides = [1, 1]} : vector<2x256xf32> to vector<2x64xf32>
    %194 = arith.mulf %192, %178 : vector<2x64xf32>
    %195 = arith.mulf %191, %190 : vector<2x64xf32>
    %196 = arith.addf %194, %195 : vector<2x64xf32>
    %197 = math.tanh %196 : vector<2x64xf32>
    %198 = arith.mulf %193, %197 : vector<2x64xf32>
    %199 = vector.extract_strided_slice %198 {offsets = [0, 0], sizes = [2, 32], strides = [1, 1]} : vector<2x64xf32> to vector<2x32xf32>
    %c0_29 = arith.constant 0 : index
    %c0_30 = arith.constant 0 : index
    %c0_31 = arith.constant 0 : index
    %200 = vector.load %arg7[%c0_29, %c0_30, %c0_31] : memref<4x2x32xf32, #tpu.memory_space<vmem>>, vector<1x2x32xf32>
    %201 = vector.shape_cast %200 : vector<1x2x32xf32> to vector<2x32xf32>
    %202 = vector.shape_cast %199 : vector<2x32xf32> to vector<1x2x32xf32>
    tpu.vector_store %arg7[%c0_29, %c0_30, %c0_31], %202 {strides = array<i32>} : memref<4x2x32xf32, #tpu.memory_space<vmem>>, vector<1x2x32xf32>,
    %203 = vector.extract_strided_slice %198 {offsets = [0, 32], sizes = [2, 32], strides = [1, 1]} : vector<2x64xf32> to vector<2x32xf32>
    %c1 = arith.constant 1 : index
    %c0_32 = arith.constant 0 : index
    %c0_33 = arith.constant 0 : index
    %204 = vector.load %arg7[%c1, %c0_32, %c0_33] : memref<4x2x32xf32, #tpu.memory_space<vmem>>, vector<1x2x32xf32>
    %205 = vector.shape_cast %204 : vector<1x2x32xf32> to vector<2x32xf32>
    %206 = vector.shape_cast %203 : vector<2x32xf32> to vector<1x2x32xf32>
    tpu.vector_store %arg7[%c1, %c0_32, %c0_33], %206 {strides = array<i32>} : memref<4x2x32xf32, #tpu.memory_space<vmem>>, vector<1x2x32xf32>,
    %207 = vector.extract_strided_slice %196 {offsets = [0, 0], sizes = [2, 32], strides = [1, 1]} : vector<2x64xf32> to vector<2x32xf32>
    %c0_34 = arith.constant 0 : index
    %c0_35 = arith.constant 0 : index
    %c0_36 = arith.constant 0 : index
    %208 = vector.load %arg8[%c0_34, %c0_35, %c0_36] : memref<4x2x32xf32, #tpu.memory_space<vmem>>, vector<1x2x32xf32>
    %209 = vector.shape_cast %208 : vector<1x2x32xf32> to vector<2x32xf32>
    %210 = vector.shape_cast %207 : vector<2x32xf32> to vector<1x2x32xf32>
    tpu.vector_store %arg8[%c0_34, %c0_35, %c0_36], %210 {strides = array<i32>} : memref<4x2x32xf32, #tpu.memory_space<vmem>>, vector<1x2x32xf32>,
    %211 = vector.extract_strided_slice %196 {offsets = [0, 32], sizes = [2, 32], strides = [1, 1]} : vector<2x64xf32> to vector<2x32xf32>
    %c1_37 = arith.constant 1 : index
    %c0_38 = arith.constant 0 : index
    %c0_39 = arith.constant 0 : index
    %212 = vector.load %arg8[%c1_37, %c0_38, %c0_39] : memref<4x2x32xf32, #tpu.memory_space<vmem>>, vector<1x2x32xf32>
    %213 = vector.shape_cast %212 : vector<1x2x32xf32> to vector<2x32xf32>
    %214 = vector.shape_cast %211 : vector<2x32xf32> to vector<1x2x32xf32>
    tpu.vector_store %arg8[%c1_37, %c0_38, %c0_39], %214 {strides = array<i32>} : memref<4x2x32xf32, #tpu.memory_space<vmem>>, vector<1x2x32xf32>,
    %215 = arith.select %21, %72, %198 : vector<2x64xi1>, vector<2x64xf32>
    %216 = arith.select %21, %90, %180 : vector<2x64xi1>, vector<2x64xf32>
    %217 = arith.select %21, %108, %162 : vector<2x64xi1>, vector<2x64xf32>
    %218 = arith.select %21, %126, %144 : vector<2x64xi1>, vector<2x64xf32>
    %219 = arith.select %21, %144, %126 : vector<2x64xi1>, vector<2x64xf32>
    %220 = arith.select %21, %162, %108 : vector<2x64xi1>, vector<2x64xf32>
    %221 = arith.select %21, %180, %90 : vector<2x64xi1>, vector<2x64xf32>
    %222 = arith.select %21, %198, %72 : vector<2x64xi1>, vector<2x64xf32>
    %223 = tpu.concatenate %215, %216, %217, %218, %219, %220, %221, %222 in 0 : vector<2x64xf32>, vector<2x64xf32>, vector<2x64xf32>, vector<2x64xf32>, vector<2x64xf32>, vector<2x64xf32>, vector<2x64xf32>, vector<2x64xf32> -> vector<16x64xf32>
    %224 = arith.truncf %223 : vector<16x64xf32> to vector<16x64xbf16>
    %c0_40 = arith.constant 0 : index
    %c0_41 = arith.constant 0 : index
    %225 = vector.load %arg4[%c0_40, %c0_41] : memref<64x256xbf16, #tpu.memory_space<vmem>>, vector<64x256xbf16>
    %c0_42 = arith.constant 0 : index
    %c0_43 = arith.constant 0 : index
    %226 = vector.load %arg5[%c0_42, %c0_43] : memref<64x256xbf16, #tpu.memory_space<vmem>>, vector<64x256xbf16>
    %c0_44 = arith.constant 0 : index
    %c0_45 = arith.constant 0 : index
    %227 = vector.load %arg6[%c0_44, %c0_45] : memref<1x256xf32, #tpu.memory_space<vmem>>, vector<1x256xf32>
    %cst_46 = arith.constant dense<0.000000e+00> : vector<16x256xf32>
    %228 = tpu.matmul %224, %225, %cst_46 {dimension_numbers = #tpu.dot_dimension_numbers<[1], [0], [0], [1], [0, 0, 1, 1], [], []>} : vector<16x64xbf16>, vector<64x256xbf16>, vector<16x256xf32> -> vector<16x256xf32>
    %229 = vector.broadcast %227 : vector<1x256xf32> to vector<16x256xf32>
    %230 = arith.addf %228, %229 : vector<16x256xf32>
    %231 = vector.extract_strided_slice %230 {offsets = [0, 0], sizes = [2, 256], strides = [1, 1]} : vector<16x256xf32> to vector<2x256xf32>
    %232 = vector.extract_strided_slice %230 {offsets = [14, 0], sizes = [2, 256], strides = [1, 1]} : vector<16x256xf32> to vector<2x256xf32>
    %233 = arith.select %18, %231, %232 : vector<2x256xi1>, vector<2x256xf32>
    %234 = vector.extract_strided_slice %230 {offsets = [2, 0], sizes = [2, 256], strides = [1, 1]} : vector<16x256xf32> to vector<2x256xf32>
    %235 = vector.extract_strided_slice %230 {offsets = [12, 0], sizes = [2, 256], strides = [1, 1]} : vector<16x256xf32> to vector<2x256xf32>
    %236 = arith.select %18, %234, %235 : vector<2x256xi1>, vector<2x256xf32>
    %237 = vector.extract_strided_slice %230 {offsets = [4, 0], sizes = [2, 256], strides = [1, 1]} : vector<16x256xf32> to vector<2x256xf32>
    %238 = vector.extract_strided_slice %230 {offsets = [10, 0], sizes = [2, 256], strides = [1, 1]} : vector<16x256xf32> to vector<2x256xf32>
    %239 = arith.select %18, %237, %238 : vector<2x256xi1>, vector<2x256xf32>
    %240 = vector.extract_strided_slice %230 {offsets = [6, 0], sizes = [2, 256], strides = [1, 1]} : vector<16x256xf32> to vector<2x256xf32>
    %241 = vector.extract_strided_slice %230 {offsets = [8, 0], sizes = [2, 256], strides = [1, 1]} : vector<16x256xf32> to vector<2x256xf32>
    %242 = arith.select %18, %240, %241 : vector<2x256xi1>, vector<2x256xf32>
    %243 = vector.extract_strided_slice %230 {offsets = [8, 0], sizes = [2, 256], strides = [1, 1]} : vector<16x256xf32> to vector<2x256xf32>
    %244 = vector.extract_strided_slice %230 {offsets = [6, 0], sizes = [2, 256], strides = [1, 1]} : vector<16x256xf32> to vector<2x256xf32>
    %245 = arith.select %18, %243, %244 : vector<2x256xi1>, vector<2x256xf32>
    %246 = vector.extract_strided_slice %230 {offsets = [10, 0], sizes = [2, 256], strides = [1, 1]} : vector<16x256xf32> to vector<2x256xf32>
    %247 = vector.extract_strided_slice %230 {offsets = [4, 0], sizes = [2, 256], strides = [1, 1]} : vector<16x256xf32> to vector<2x256xf32>
    %248 = arith.select %18, %246, %247 : vector<2x256xi1>, vector<2x256xf32>
    %249 = vector.extract_strided_slice %230 {offsets = [12, 0], sizes = [2, 256], strides = [1, 1]} : vector<16x256xf32> to vector<2x256xf32>
    %250 = vector.extract_strided_slice %230 {offsets = [2, 0], sizes = [2, 256], strides = [1, 1]} : vector<16x256xf32> to vector<2x256xf32>
    %251 = arith.select %18, %249, %250 : vector<2x256xi1>, vector<2x256xf32>
    %252 = vector.extract_strided_slice %230 {offsets = [14, 0], sizes = [2, 256], strides = [1, 1]} : vector<16x256xf32> to vector<2x256xf32>
    %253 = vector.extract_strided_slice %230 {offsets = [0, 0], sizes = [2, 256], strides = [1, 1]} : vector<16x256xf32> to vector<2x256xf32>
    %254 = arith.select %18, %252, %253 : vector<2x256xi1>, vector<2x256xf32>
    %cst_47 = arith.constant 0.000000e+00 : f32
    %255 = vector.broadcast %cst_47 : f32 to vector<2x64xf32>
    %cst_48 = arith.constant 0.000000e+00 : f32
    %256 = vector.broadcast %cst_48 : f32 to vector<2x64xf32>
    %257 = arith.truncf %255 : vector<2x64xf32> to vector<2x64xbf16>
    %cst_49 = arith.constant dense<0.000000e+00> : vector<2x256xf32>
    %258 = tpu.matmul %257, %226, %cst_49 {dimension_numbers = #tpu.dot_dimension_numbers<[1], [0], [0], [1], [0, 0, 1, 1], [], []>} : vector<2x64xbf16>, vector<64x256xbf16>, vector<2x256xf32> -> vector<2x256xf32>
    %259 = arith.addf %233, %258 : vector<2x256xf32>
    %260 = arith.negf %259 : vector<2x256xf32>
    %261 = math.exp %260 : vector<2x256xf32>
    %cst_50 = arith.constant 1.000000e+00 : f32
    %262 = vector.broadcast %cst_50 : f32 to vector<2x256xf32>
    %263 = arith.addf %262, %261 : vector<2x256xf32>
    %264 = arith.divf %262, %263 : vector<2x256xf32>
    %265 = vector.extract_strided_slice %259 {offsets = [0, 192], sizes = [2, 64], strides = [1, 1]} : vector<2x256xf32> to vector<2x64xf32>
    %266 = math.tanh %265 : vector<2x64xf32>
    %267 = vector.extract_strided_slice %264 {offsets = [0, 0], sizes = [2, 64], strides = [1, 1]} : vector<2x256xf32> to vector<2x64xf32>
    %268 = vector.extract_strided_slice %264 {offsets = [0, 64], sizes = [2, 64], strides = [1, 1]} : vector<2x256xf32> to vector<2x64xf32>
    %269 = vector.extract_strided_slice %264 {offsets = [0, 128], sizes = [2, 64], strides = [1, 1]} : vector<2x256xf32> to vector<2x64xf32>
    %270 = arith.mulf %268, %256 : vector<2x64xf32>
    %271 = arith.mulf %267, %266 : vector<2x64xf32>
    %272 = arith.addf %270, %271 : vector<2x64xf32>
    %273 = math.tanh %272 : vector<2x64xf32>
    %274 = arith.mulf %269, %273 : vector<2x64xf32>
    %275 = arith.truncf %274 : vector<2x64xf32> to vector<2x64xbf16>
    %cst_51 = arith.constant dense<0.000000e+00> : vector<2x256xf32>
    %276 = tpu.matmul %275, %226, %cst_51 {dimension_numbers = #tpu.dot_dimension_numbers<[1], [0], [0], [1], [0, 0, 1, 1], [], []>} : vector<2x64xbf16>, vector<64x256xbf16>, vector<2x256xf32> -> vector<2x256xf32>
    %277 = arith.addf %236, %276 : vector<2x256xf32>
    %278 = arith.negf %277 : vector<2x256xf32>
    %279 = math.exp %278 : vector<2x256xf32>
    %cst_52 = arith.constant 1.000000e+00 : f32
    %280 = vector.broadcast %cst_52 : f32 to vector<2x256xf32>
    %281 = arith.addf %280, %279 : vector<2x256xf32>
    %282 = arith.divf %280, %281 : vector<2x256xf32>
    %283 = vector.extract_strided_slice %277 {offsets = [0, 192], sizes = [2, 64], strides = [1, 1]} : vector<2x256xf32> to vector<2x64xf32>
    %284 = math.tanh %283 : vector<2x64xf32>
    %285 = vector.extract_strided_slice %282 {offsets = [0, 0], sizes = [2, 64], strides = [1, 1]} : vector<2x256xf32> to vector<2x64xf32>
    %286 = vector.extract_strided_slice %282 {offsets = [0, 64], sizes = [2, 64], strides = [1, 1]} : vector<2x256xf32> to vector<2x64xf32>
    %287 = vector.extract_strided_slice %282 {offsets = [0, 128], sizes = [2, 64], strides = [1, 1]} : vector<2x256xf32> to vector<2x64xf32>
    %288 = arith.mulf %286, %272 : vector<2x64xf32>
    %289 = arith.mulf %285, %284 : vector<2x64xf32>
    %290 = arith.addf %288, %289 : vector<2x64xf32>
    %291 = math.tanh %290 : vector<2x64xf32>
    %292 = arith.mulf %287, %291 : vector<2x64xf32>
    %293 = arith.truncf %292 : vector<2x64xf32> to vector<2x64xbf16>
    %cst_53 = arith.constant dense<0.000000e+00> : vector<2x256xf32>
    %294 = tpu.matmul %293, %226, %cst_53 {dimension_numbers = #tpu.dot_dimension_numbers<[1], [0], [0], [1], [0, 0, 1, 1], [], []>} : vector<2x64xbf16>, vector<64x256xbf16>, vector<2x256xf32> -> vector<2x256xf32>
    %295 = arith.addf %239, %294 : vector<2x256xf32>
    %296 = arith.negf %295 : vector<2x256xf32>
    %297 = math.exp %296 : vector<2x256xf32>
    %cst_54 = arith.constant 1.000000e+00 : f32
    %298 = vector.broadcast %cst_54 : f32 to vector<2x256xf32>
    %299 = arith.addf %298, %297 : vector<2x256xf32>
    %300 = arith.divf %298, %299 : vector<2x256xf32>
    %301 = vector.extract_strided_slice %295 {offsets = [0, 192], sizes = [2, 64], strides = [1, 1]} : vector<2x256xf32> to vector<2x64xf32>
    %302 = math.tanh %301 : vector<2x64xf32>
    %303 = vector.extract_strided_slice %300 {offsets = [0, 0], sizes = [2, 64], strides = [1, 1]} : vector<2x256xf32> to vector<2x64xf32>
    %304 = vector.extract_strided_slice %300 {offsets = [0, 64], sizes = [2, 64], strides = [1, 1]} : vector<2x256xf32> to vector<2x64xf32>
    %305 = vector.extract_strided_slice %300 {offsets = [0, 128], sizes = [2, 64], strides = [1, 1]} : vector<2x256xf32> to vector<2x64xf32>
    %306 = arith.mulf %304, %290 : vector<2x64xf32>
    %307 = arith.mulf %303, %302 : vector<2x64xf32>
    %308 = arith.addf %306, %307 : vector<2x64xf32>
    %309 = math.tanh %308 : vector<2x64xf32>
    %310 = arith.mulf %305, %309 : vector<2x64xf32>
    %311 = arith.truncf %310 : vector<2x64xf32> to vector<2x64xbf16>
    %cst_55 = arith.constant dense<0.000000e+00> : vector<2x256xf32>
    %312 = tpu.matmul %311, %226, %cst_55 {dimension_numbers = #tpu.dot_dimension_numbers<[1], [0], [0], [1], [0, 0, 1, 1], [], []>} : vector<2x64xbf16>, vector<64x256xbf16>, vector<2x256xf32> -> vector<2x256xf32>
    %313 = arith.addf %242, %312 : vector<2x256xf32>
    %314 = arith.negf %313 : vector<2x256xf32>
    %315 = math.exp %314 : vector<2x256xf32>
    %cst_56 = arith.constant 1.000000e+00 : f32
    %316 = vector.broadcast %cst_56 : f32 to vector<2x256xf32>
    %317 = arith.addf %316, %315 : vector<2x256xf32>
    %318 = arith.divf %316, %317 : vector<2x256xf32>
    %319 = vector.extract_strided_slice %313 {offsets = [0, 192], sizes = [2, 64], strides = [1, 1]} : vector<2x256xf32> to vector<2x64xf32>
    %320 = math.tanh %319 : vector<2x64xf32>
    %321 = vector.extract_strided_slice %318 {offsets = [0, 0], sizes = [2, 64], strides = [1, 1]} : vector<2x256xf32> to vector<2x64xf32>
    %322 = vector.extract_strided_slice %318 {offsets = [0, 64], sizes = [2, 64], strides = [1, 1]} : vector<2x256xf32> to vector<2x64xf32>
    %323 = vector.extract_strided_slice %318 {offsets = [0, 128], sizes = [2, 64], strides = [1, 1]} : vector<2x256xf32> to vector<2x64xf32>
    %324 = arith.mulf %322, %308 : vector<2x64xf32>
    %325 = arith.mulf %321, %320 : vector<2x64xf32>
    %326 = arith.addf %324, %325 : vector<2x64xf32>
    %327 = math.tanh %326 : vector<2x64xf32>
    %328 = arith.mulf %323, %327 : vector<2x64xf32>
    %329 = arith.truncf %328 : vector<2x64xf32> to vector<2x64xbf16>
    %cst_57 = arith.constant dense<0.000000e+00> : vector<2x256xf32>
    %330 = tpu.matmul %329, %226, %cst_57 {dimension_numbers = #tpu.dot_dimension_numbers<[1], [0], [0], [1], [0, 0, 1, 1], [], []>} : vector<2x64xbf16>, vector<64x256xbf16>, vector<2x256xf32> -> vector<2x256xf32>
    %331 = arith.addf %245, %330 : vector<2x256xf32>
    %332 = arith.negf %331 : vector<2x256xf32>
    %333 = math.exp %332 : vector<2x256xf32>
    %cst_58 = arith.constant 1.000000e+00 : f32
    %334 = vector.broadcast %cst_58 : f32 to vector<2x256xf32>
    %335 = arith.addf %334, %333 : vector<2x256xf32>
    %336 = arith.divf %334, %335 : vector<2x256xf32>
    %337 = vector.extract_strided_slice %331 {offsets = [0, 192], sizes = [2, 64], strides = [1, 1]} : vector<2x256xf32> to vector<2x64xf32>
    %338 = math.tanh %337 : vector<2x64xf32>
    %339 = vector.extract_strided_slice %336 {offsets = [0, 0], sizes = [2, 64], strides = [1, 1]} : vector<2x256xf32> to vector<2x64xf32>
    %340 = vector.extract_strided_slice %336 {offsets = [0, 64], sizes = [2, 64], strides = [1, 1]} : vector<2x256xf32> to vector<2x64xf32>
    %341 = vector.extract_strided_slice %336 {offsets = [0, 128], sizes = [2, 64], strides = [1, 1]} : vector<2x256xf32> to vector<2x64xf32>
    %342 = arith.mulf %340, %326 : vector<2x64xf32>
    %343 = arith.mulf %339, %338 : vector<2x64xf32>
    %344 = arith.addf %342, %343 : vector<2x64xf32>
    %345 = math.tanh %344 : vector<2x64xf32>
    %346 = arith.mulf %341, %345 : vector<2x64xf32>
    %347 = arith.truncf %346 : vector<2x64xf32> to vector<2x64xbf16>
    %cst_59 = arith.constant dense<0.000000e+00> : vector<2x256xf32>
    %348 = tpu.matmul %347, %226, %cst_59 {dimension_numbers = #tpu.dot_dimension_numbers<[1], [0], [0], [1], [0, 0, 1, 1], [], []>} : vector<2x64xbf16>, vector<64x256xbf16>, vector<2x256xf32> -> vector<2x256xf32>
    %349 = arith.addf %248, %348 : vector<2x256xf32>
    %350 = arith.negf %349 : vector<2x256xf32>
    %351 = math.exp %350 : vector<2x256xf32>
    %cst_60 = arith.constant 1.000000e+00 : f32
    %352 = vector.broadcast %cst_60 : f32 to vector<2x256xf32>
    %353 = arith.addf %352, %351 : vector<2x256xf32>
    %354 = arith.divf %352, %353 : vector<2x256xf32>
    %355 = vector.extract_strided_slice %349 {offsets = [0, 192], sizes = [2, 64], strides = [1, 1]} : vector<2x256xf32> to vector<2x64xf32>
    %356 = math.tanh %355 : vector<2x64xf32>
    %357 = vector.extract_strided_slice %354 {offsets = [0, 0], sizes = [2, 64], strides = [1, 1]} : vector<2x256xf32> to vector<2x64xf32>
    %358 = vector.extract_strided_slice %354 {offsets = [0, 64], sizes = [2, 64], strides = [1, 1]} : vector<2x256xf32> to vector<2x64xf32>
    %359 = vector.extract_strided_slice %354 {offsets = [0, 128], sizes = [2, 64], strides = [1, 1]} : vector<2x256xf32> to vector<2x64xf32>
    %360 = arith.mulf %358, %344 : vector<2x64xf32>
    %361 = arith.mulf %357, %356 : vector<2x64xf32>
    %362 = arith.addf %360, %361 : vector<2x64xf32>
    %363 = math.tanh %362 : vector<2x64xf32>
    %364 = arith.mulf %359, %363 : vector<2x64xf32>
    %365 = arith.truncf %364 : vector<2x64xf32> to vector<2x64xbf16>
    %cst_61 = arith.constant dense<0.000000e+00> : vector<2x256xf32>
    %366 = tpu.matmul %365, %226, %cst_61 {dimension_numbers = #tpu.dot_dimension_numbers<[1], [0], [0], [1], [0, 0, 1, 1], [], []>} : vector<2x64xbf16>, vector<64x256xbf16>, vector<2x256xf32> -> vector<2x256xf32>
    %367 = arith.addf %251, %366 : vector<2x256xf32>
    %368 = arith.negf %367 : vector<2x256xf32>
    %369 = math.exp %368 : vector<2x256xf32>
    %cst_62 = arith.constant 1.000000e+00 : f32
    %370 = vector.broadcast %cst_62 : f32 to vector<2x256xf32>
    %371 = arith.addf %370, %369 : vector<2x256xf32>
    %372 = arith.divf %370, %371 : vector<2x256xf32>
    %373 = vector.extract_strided_slice %367 {offsets = [0, 192], sizes = [2, 64], strides = [1, 1]} : vector<2x256xf32> to vector<2x64xf32>
    %374 = math.tanh %373 : vector<2x64xf32>
    %375 = vector.extract_strided_slice %372 {offsets = [0, 0], sizes = [2, 64], strides = [1, 1]} : vector<2x256xf32> to vector<2x64xf32>
    %376 = vector.extract_strided_slice %372 {offsets = [0, 64], sizes = [2, 64], strides = [1, 1]} : vector<2x256xf32> to vector<2x64xf32>
    %377 = vector.extract_strided_slice %372 {offsets = [0, 128], sizes = [2, 64], strides = [1, 1]} : vector<2x256xf32> to vector<2x64xf32>
    %378 = arith.mulf %376, %362 : vector<2x64xf32>
    %379 = arith.mulf %375, %374 : vector<2x64xf32>
    %380 = arith.addf %378, %379 : vector<2x64xf32>
    %381 = math.tanh %380 : vector<2x64xf32>
    %382 = arith.mulf %377, %381 : vector<2x64xf32>
    %383 = arith.truncf %382 : vector<2x64xf32> to vector<2x64xbf16>
    %cst_63 = arith.constant dense<0.000000e+00> : vector<2x256xf32>
    %384 = tpu.matmul %383, %226, %cst_63 {dimension_numbers = #tpu.dot_dimension_numbers<[1], [0], [0], [1], [0, 0, 1, 1], [], []>} : vector<2x64xbf16>, vector<64x256xbf16>, vector<2x256xf32> -> vector<2x256xf32>
    %385 = arith.addf %254, %384 : vector<2x256xf32>
    %386 = arith.negf %385 : vector<2x256xf32>
    %387 = math.exp %386 : vector<2x256xf32>
    %cst_64 = arith.constant 1.000000e+00 : f32
    %388 = vector.broadcast %cst_64 : f32 to vector<2x256xf32>
    %389 = arith.addf %388, %387 : vector<2x256xf32>
    %390 = arith.divf %388, %389 : vector<2x256xf32>
    %391 = vector.extract_strided_slice %385 {offsets = [0, 192], sizes = [2, 64], strides = [1, 1]} : vector<2x256xf32> to vector<2x64xf32>
    %392 = math.tanh %391 : vector<2x64xf32>
    %393 = vector.extract_strided_slice %390 {offsets = [0, 0], sizes = [2, 64], strides = [1, 1]} : vector<2x256xf32> to vector<2x64xf32>
    %394 = vector.extract_strided_slice %390 {offsets = [0, 64], sizes = [2, 64], strides = [1, 1]} : vector<2x256xf32> to vector<2x64xf32>
    %395 = vector.extract_strided_slice %390 {offsets = [0, 128], sizes = [2, 64], strides = [1, 1]} : vector<2x256xf32> to vector<2x64xf32>
    %396 = arith.mulf %394, %380 : vector<2x64xf32>
    %397 = arith.mulf %393, %392 : vector<2x64xf32>
    %398 = arith.addf %396, %397 : vector<2x64xf32>
    %399 = math.tanh %398 : vector<2x64xf32>
    %400 = arith.mulf %395, %399 : vector<2x64xf32>
    %401 = vector.extract_strided_slice %400 {offsets = [0, 0], sizes = [2, 32], strides = [1, 1]} : vector<2x64xf32> to vector<2x32xf32>
    %c2 = arith.constant 2 : index
    %c0_65 = arith.constant 0 : index
    %c0_66 = arith.constant 0 : index
    %402 = vector.load %arg7[%c2, %c0_65, %c0_66] : memref<4x2x32xf32, #tpu.memory_space<vmem>>, vector<1x2x32xf32>
    %403 = vector.shape_cast %402 : vector<1x2x32xf32> to vector<2x32xf32>
    %404 = vector.shape_cast %401 : vector<2x32xf32> to vector<1x2x32xf32>
    tpu.vector_store %arg7[%c2, %c0_65, %c0_66], %404 {strides = array<i32>} : memref<4x2x32xf32, #tpu.memory_space<vmem>>, vector<1x2x32xf32>,
    %405 = vector.extract_strided_slice %400 {offsets = [0, 32], sizes = [2, 32], strides = [1, 1]} : vector<2x64xf32> to vector<2x32xf32>
    %c3 = arith.constant 3 : index
    %c0_67 = arith.constant 0 : index
    %c0_68 = arith.constant 0 : index
    %406 = vector.load %arg7[%c3, %c0_67, %c0_68] : memref<4x2x32xf32, #tpu.memory_space<vmem>>, vector<1x2x32xf32>
    %407 = vector.shape_cast %406 : vector<1x2x32xf32> to vector<2x32xf32>
    %408 = vector.shape_cast %405 : vector<2x32xf32> to vector<1x2x32xf32>
    tpu.vector_store %arg7[%c3, %c0_67, %c0_68], %408 {strides = array<i32>} : memref<4x2x32xf32, #tpu.memory_space<vmem>>, vector<1x2x32xf32>,
    %409 = vector.extract_strided_slice %398 {offsets = [0, 0], sizes = [2, 32], strides = [1, 1]} : vector<2x64xf32> to vector<2x32xf32>
    %c2_69 = arith.constant 2 : index
    %c0_70 = arith.constant 0 : index
    %c0_71 = arith.constant 0 : index
    %410 = vector.load %arg8[%c2_69, %c0_70, %c0_71] : memref<4x2x32xf32, #tpu.memory_space<vmem>>, vector<1x2x32xf32>
    %411 = vector.shape_cast %410 : vector<1x2x32xf32> to vector<2x32xf32>
    %412 = vector.shape_cast %409 : vector<2x32xf32> to vector<1x2x32xf32>
    tpu.vector_store %arg8[%c2_69, %c0_70, %c0_71], %412 {strides = array<i32>} : memref<4x2x32xf32, #tpu.memory_space<vmem>>, vector<1x2x32xf32>,
    %413 = vector.extract_strided_slice %398 {offsets = [0, 32], sizes = [2, 32], strides = [1, 1]} : vector<2x64xf32> to vector<2x32xf32>
    %c3_72 = arith.constant 3 : index
    %c0_73 = arith.constant 0 : index
    %c0_74 = arith.constant 0 : index
    %414 = vector.load %arg8[%c3_72, %c0_73, %c0_74] : memref<4x2x32xf32, #tpu.memory_space<vmem>>, vector<1x2x32xf32>
    %415 = vector.shape_cast %414 : vector<1x2x32xf32> to vector<2x32xf32>
    %416 = vector.shape_cast %413 : vector<2x32xf32> to vector<1x2x32xf32>
    tpu.vector_store %arg8[%c3_72, %c0_73, %c0_74], %416 {strides = array<i32>} : memref<4x2x32xf32, #tpu.memory_space<vmem>>, vector<1x2x32xf32>,
    return
  }
}

</mosaic_0001>

<llo_original>
// kernel: encoder_forward.1
$region0: #{encoder_forward.1}
  #allocation0 [shape = 'u32[]', space=smem, size = 0x4, offset = 0x4, fixed_abs, tag = 'smem constant byte address 0x4 - core index']
  #allocation1 [shape = 'u32[144,128]{1,0:T(1,128)}', space=vmem, size = 0x12000, scoped, tag = 'internal scratch']
  %s0 = inlined_call_operand.vmem [shape: bf16[16,32], index: 0, kind: input, shape index: {}]
  %s1 = inlined_call_operand.hbm [shape: bf16[32,256], index: 1, kind: input, shape index: {}]
  %s2 = inlined_call_operand.vmem [shape: bf16[64,256], index: 2, kind: input, shape index: {}]
  %s3 = inlined_call_operand.hbm [shape: f32[1,256], index: 3, kind: input, shape index: {}]
  %s4 = inlined_call_operand.vmem [shape: bf16[64,256], index: 4, kind: input, shape index: {}]
  %s5 = inlined_call_operand.hbm [shape: bf16[64,256], index: 5, kind: input, shape index: {}]
  %s6 = inlined_call_operand.hbm [shape: f32[1,256], index: 6, kind: input, shape index: {}]
  %s7 = inlined_call_operand.hbm [shape: f32[4,2,32], index: 7, kind: output, shape index: {0}]
  %s8 = inlined_call_operand.hbm [shape: f32[4,2,32], index: 8, kind: output, shape index: {1}]
  %9 = xla_tuple %s7, %s8
  %s10 = sld [smem:[#allocation0]]
  $region62: #{encoder_forward.1} parent=0
    _
  %s12 = ssub.s32 1, %s10
  %s13 = scalar_select 0, %s12, %s10
  $region1: #{encoder_forward.1} parent=0
    #allocation2 [shape = 'u8[16384]{0}', space=vmem, size = 0x4000, scoped, tag = 'input window, operand 1, single buffered']
    #allocation3 [shape = 's32[1]{0}', space=sflag, size = 0x4, scoped, tag = 'scoped memory for encoder_forward.1']
    #allocation4 [shape = 's32[1]{0}', space=sflag, size = 0x4, scoped, tag = 'scoped memory for encoder_forward.1']
    #allocation5 [shape = 'u8[1024]{0}', space=vmem, size = 0x400, scoped, tag = 'input window, operand 3, single buffered']
    #allocation6 [shape = 's32[1]{0}', space=sflag, size = 0x4, scoped, tag = 'scoped memory for encoder_forward.1']
    #allocation7 [shape = 'u8[32768]{0}', space=vmem, size = 0x8000, scoped, tag = 'input window, operand 5, single buffered']
    #allocation8 [shape = 'u8[1024]{0}', space=vmem, size = 0x400, scoped, tag = 'input window, operand 6, single buffered']
    #allocation9 [shape = 's32[1]{0}', space=sflag, size = 0x4, scoped, tag = 'scoped memory for encoder_forward.1']
    #allocation10 [shape = 'u8[4096]{0}', space=vmem, size = 0x1000, scoped, tag = 'output window, operand 0, single buffered']
    #allocation11 [shape = 'u8[4096]{0}', space=vmem, size = 0x1000, scoped, tag = 'output window, operand 1, single buffered']
    #allocation12 [shape = 's32[1]{0}', space=sflag, size = 0x4, scoped, tag = 'scoped memory for encoder_forward.1']
    %14 = vsyncpa [#allocation3], 0
    %15 = vsyncpa [#allocation6], 0
    %16 = vsyncpa [#allocation9], 0
    %17 = vsyncpa [#allocation4], 0
    %18 = vsyncpa [#allocation12], 0
    // Predicated region
    $region2: #{encoder_forward.1} parent=1 // pred_check
      _
    $region3: #{encoder_forward.1} parent=1 // pred_check_branch
      %20 = sbr.rel (0) target = $region5
    $region4: #{encoder_forward.1} parent=1 // pred_region
      _
    $region5: #{encoder_forward.1} parent=1 // pred_fallthru
      _
    // Predicated region
    $region6: #{encoder_forward.1} parent=1 // pred_check
      _
    $region7: #{encoder_forward.1} parent=1 // pred_check_branch
      %22 = sbr.rel (0) target = $region9
    $region8: #{encoder_forward.1} parent=1 // pred_region
      %s24 = ssub.s32 512, 512
      %25 = vsyncadd [#allocation3], %s24
      %s26 = sshll.u32 [#allocation2], 4
      %s27 = int_to_ptr.vmem [resolvable:$true] %s26
      %32 = dma.hbm_to_vmem [thread:$0]  %s1, 512, %s27, [#allocation3], 128, 128, 8
    $region9: #{encoder_forward.1} parent=1 // pred_fallthru
      _
    // Predicated region
    $region10: #{encoder_forward.1} parent=1 // pred_check
      _
    $region11: #{encoder_forward.1} parent=1 // pred_check_branch
      %34 = sbr.rel (0) target = $region13
    $region12: #{encoder_forward.1} parent=1 // pred_region
      _
    $region13: #{encoder_forward.1} parent=1 // pred_fallthru
      _
    // Predicated region
    $region14: #{encoder_forward.1} parent=1 // pred_check
      _
    $region15: #{encoder_forward.1} parent=1 // pred_check_branch
      %36 = sbr.rel (0) target = $region17
    $region16: #{encoder_forward.1} parent=1 // pred_region
      %s38 = ssub.s32 32, 32
      %39 = vsyncadd [#allocation6], %s38
      %s41 = sshll.u32 [#allocation5], 4
      %s42 = int_to_ptr.vmem [resolvable:$true] %s41
      %44 = dma.hbm_to_vmem [thread:$0]  %s3, 32, %s42, [#allocation6]
    $region17: #{encoder_forward.1} parent=1 // pred_fallthru
      _
    // Predicated region
    $region18: #{encoder_forward.1} parent=1 // pred_check
      _
    $region19: #{encoder_forward.1} parent=1 // pred_check_branch
      %46 = sbr.rel (0) target = $region21
    $region20: #{encoder_forward.1} parent=1 // pred_region
      _
    $region21: #{encoder_forward.1} parent=1 // pred_fallthru
      _
    // Predicated region
    $region22: #{encoder_forward.1} parent=1 // pred_check
      _
    $region23: #{encoder_forward.1} parent=1 // pred_check_branch
      %48 = sbr.rel (0) target = $region25
    $region24: #{encoder_forward.1} parent=1 // pred_region
      %s50 = ssub.s32 1024, 1024
      %51 = vsyncadd [#allocation6], %s50
      %s52 = sshll.u32 [#allocation7], 4
      %s53 = int_to_ptr.vmem [resolvable:$true] %s52
      %58 = dma.hbm_to_vmem [thread:$0]  %s5, 1024, %s53, [#allocation6], 128, 128, 8
    $region25: #{encoder_forward.1} parent=1 // pred_fallthru
      _
    // Predicated region
    $region26: #{encoder_forward.1} parent=1 // pred_check
      _
    $region27: #{encoder_forward.1} parent=1 // pred_check_branch
      %60 = sbr.rel (0) target = $region29
    $region28: #{encoder_forward.1} parent=1 // pred_region
      %s62 = ssub.s32 32, 32
      %63 = vsyncadd [#allocation9], %s62
      %s65 = sshll.u32 [#allocation8], 4
      %s66 = int_to_ptr.vmem [resolvable:$true] %s65
      %68 = dma.hbm_to_vmem [thread:$0]  %s6, 32, %s66, [#allocation9]
    $region29: #{encoder_forward.1} parent=1 // pred_fallthru
      _
    // Predicated region
    $region30: #{encoder_forward.1} parent=1 // pred_check
      _
    $region31: #{encoder_forward.1} parent=1 // pred_check_branch
      %70 = sbr.rel (0) target = $region33
    $region32: #{encoder_forward.1} parent=1 // pred_region
      %71 = dma.done [#allocation3], 512
    $region33: #{encoder_forward.1} parent=1 // pred_fallthru
      _
    // Predicated region
    $region34: #{encoder_forward.1} parent=1 // pred_check
      _
    $region35: #{encoder_forward.1} parent=1 // pred_check_branch
      %73 = sbr.rel (0) target = $region37
    $region36: #{encoder_forward.1} parent=1 // pred_region
      %74 = dma.done [#allocation6], 32
    $region37: #{encoder_forward.1} parent=1 // pred_fallthru
      _
    // Predicated region
    $region38: #{encoder_forward.1} parent=1 // pred_check
      _
    $region39: #{encoder_forward.1} parent=1 // pred_check_branch
      %76 = sbr.rel (0) target = $region41
    $region40: #{encoder_forward.1} parent=1 // pred_region
      %77 = dma.done [#allocation6], 1024
    $region41: #{encoder_forward.1} parent=1 // pred_fallthru
      _
    // Predicated region
    $region42: #{encoder_forward.1} parent=1 // pred_check
      _
    $region43: #{encoder_forward.1} parent=1 // pred_check_branch
      %79 = sbr.rel (0) target = $region45
    $region44: #{encoder_forward.1} parent=1 // pred_region
      %80 = dma.done [#allocation9], 32
    $region45: #{encoder_forward.1} parent=1 // pred_fallthru
      _
    %v82 = vlaneseq
    %v83 = vand.u32 %v82, 127
    %v84 = vadd.s32 %v83, 128
    %vm85 = vcmp.lt.s32.totalorder %v83, 0
    %v86 = vsub.s32 0, %v83
    %v87 = vsel %vm85, %v86, %v83
    %v88 = vshrl.u32 %v87, 6
    %v89 = vand.u32 %v87, 63
    %v90 = vsub.s32 0, %v89
    %v91 = vsel %vm85, %v90, %v89
    %vm92 = vcmp.lt.s32.totalorder %v84, 0
    %v93 = vsub.s32 0, %v84
    %v94 = vsel %vm92, %v93, %v84
    %v95 = vshrl.u32 %v94, 6
    %v96 = vand.u32 %v94, 63
    %v97 = vsub.s32 0, %v96
    %v98 = vsel %vm92, %v97, %v96
    %vm99 = vcmp.ne.s32.totalorder %v91, 0
    %vm100 = vcmp.ne.s32.totalorder %v98, 0
    %vm101 = vcmp.lt.s32.totalorder %v91, 0
    %vm102 = vcmp.lt.s32.totalorder %v98, 0
    %vm103 = vmand %vm101, %vm99
    %vm104 = vmand %vm102, %vm100
    %v105 = vadd.s32 %v91, 64
    %v106 = vadd.s32 %v98, 64
    %v107 = vsel %vm103, %v105, %v91
    %v108 = vsel %vm104, %v106, %v98
    %vm109 = vcmp.lt.s32.totalorder %v107, 32
    %vm110 = vcmp.lt.s32.totalorder %v108, 32
    %vm111 = vcmp.lt.s32.totalorder %v83, 32
    %v112 = vld [vmem:[%s0] sm:$0xf]
    %v113 = vld [vmem:[%s0 + $0x4] sm:$0xf]
    %v114 = vld [vmem:[#allocation2] sm:$0xff]
    %v115 = vld [vmem:[#allocation2 + $0x8] sm:$0xff]
    %v116 = vld [vmem:[#allocation2 + $0x10] sm:$0xff]
    %v117 = vld [vmem:[#allocation2 + $0x18] sm:$0xff]
    %v118 = vld [vmem:[%s2] sm:$0xff]
    %v119 = vld [vmem:[%s2 + $0x8] sm:$0xff]
    %v120 = vld [vmem:[%s2 + $0x10] sm:$0xff]
    %v121 = vld [vmem:[%s2 + $0x18] sm:$0xff]
    %v122 = vld [vmem:[%s2 + $0x20] sm:$0xff]
    %v123 = vld [vmem:[%s2 + $0x28] sm:$0xff]
    %v124 = vld [vmem:[%s2 + $0x30] sm:$0xff]
    %v125 = vld [vmem:[%s2 + $0x38] sm:$0xff]
    %v126 = vld [vmem:[#allocation5] sm:$0x3]
    %v128 = vlaneseq
    %v129 = vshrl.u32 %v128, 7
    %v130 = vsub.s32 0, %v129
    %v131 = vrot.slane %v126, %v130
    %v132 = vlaneseq
    %v133 = vshrl.u32 %v132, 7
    %v134 = vsub.s32 1, %v133
    %v135 = vrot.slane %v126, %v134
    %v140 = vunpack.c.l.b16 %v112
    %v141 = vunpack.c.l.b16 %v113
    %v142 = vpack.c.b16 %v141, %v140
    %v147 = vunpack.c.l.b16 %v114
    %v148 = vunpack.c.h.b16 %v114
    %v149 = vunpack.c.l.b16 %v115
    %v150 = vunpack.c.h.b16 %v115
    %v151 = vunpack.c.l.b16 %v116
    %v152 = vunpack.c.h.b16 %v116
    %v153 = vunpack.c.l.b16 %v117
    %v154 = vunpack.c.h.b16 %v117
    %v155 = vpack.c.b16 %v149, %v147
    %v156 = vpack.c.b16 %v150, %v148
    %v157 = vpack.c.b16 %v153, %v151
    %v158 = vpack.c.b16 %v154, %v152
    %vm163 = vcmask 261120
    %v165 = vsel %vm163, %v142, 0
    %167 = vmatprep.subr.bf16.mxu0 0
    %168 = vmatpush1.bf16.msra.mxu0 0
    %169 = vmatprep.subr.bf16.mxu0 0
    %170 = vmatpush1.bf16.msra.mxu0 0
    %171 = vmatprep.subr.bf16.mxu0 0
    %172 = vmatpush1.bf16.msra.mxu0 0
    %173 = vmatprep.subr.bf16.mxu0 0
    %174 = vmatpush1.bf16.msra.mxu0 0
    %175 = vmatprep.subr.bf16.mxu0 0
    %176 = vmatpush1.bf16.msra.mxu0 0
    %177 = vmatprep.subr.bf16.mxu0 0
    %178 = vmatpush1.bf16.msra.mxu0 0
    %179 = vmatprep.subr.bf16.mxu0 %v158
    %180 = vmatpush1.bf16.msra.mxu0 %v157
    %181 = vmatprep.subr.bf16.mxu0 %v156
    %182 = vmatpush1.bf16.msra.mxu0 %v155
    %183 = vmatprep.subr.bf16.mxu0 0
    %184 = vmatpush2.bf16.msra.mxu0 0
    %185 = vmatprep.subr.bf16.mxu0 0
    %186 = vmatpush2.bf16.msra.mxu0 0
    %187 = vmatprep.subr.bf16.mxu0 0
    %188 = vmatpush2.bf16.msra.mxu0 0
    %189 = vmatprep.subr.bf16.mxu0 0
    %190 = vmatpush2.bf16.msra.mxu0 0
    %191 = vmatprep.subr.bf16.mxu0 0
    %192 = vmatpush2.bf16.msra.mxu0 0
    %193 = vmatprep.subr.bf16.mxu0 0
    %194 = vmatpush2.bf16.msra.mxu0 0
    %195 = vmatprep.subr.bf16.mxu0 0
    %196 = vmatpush2.bf16.msra.mxu0 0
    %197 = vmatprep.subr.bf16.mxu0 0
    %198 = vmatpush2.bf16.msra.mxu0 0
    %199 = vmatprep.mubr.bf16.mxu0 0
    %200 = vmatmul.mubr.bf16.gmra.mxu0 %v165
    %v201 = vpop.f32.mrf.mxu0
    %v202 = vadd.f32 %v131, %v201
    %v203 = vpop.f32.mrf.mxu0
    %v204 = vadd.f32 %v135, %v203
    %v205 = vpop.f32.mrf.mxu0
    %v206 = vadd.f32 %v131, %v205
    %v207 = vpop.f32.mrf.mxu0
    %v208 = vadd.f32 %v135, %v207
    %209 = vdwg.mxu0
    %v212 = vrot.slane %v206, 6
    %v213 = vrot.slane %v208, 6
    %v216 = vsel %vm109, %v202, %v212
    %v217 = vsel %vm110, %v204, %v213
    %v218 = vrot.slane %v206, 2
    %v219 = vrot.slane %v208, 2
    %v222 = vsel %vm109, %v202, %v218
    %v223 = vsel %vm110, %v204, %v219
    %v226 = vrot.slane %v202, 6
    %v227 = vrot.slane %v204, 6
    %v230 = vsel %vm109, %v206, %v226
    %v231 = vsel %vm110, %v208, %v227
    %v232 = vrot.slane %v202, 2
    %v233 = vrot.slane %v204, 2
    %v236 = vsel %vm109, %v206, %v232
    %v237 = vsel %vm110, %v208, %v233
    %v246 = vunpack.c.l.b16 %v118
    %v247 = vunpack.c.h.b16 %v118
    %v248 = vunpack.c.l.b16 %v119
    %v249 = vunpack.c.h.b16 %v119
    %v250 = vunpack.c.l.b16 %v120
    %v251 = vunpack.c.h.b16 %v120
    %v252 = vunpack.c.l.b16 %v121
    %v253 = vunpack.c.h.b16 %v121
    %v254 = vunpack.c.l.b16 %v122
    %v255 = vunpack.c.h.b16 %v122
    %v256 = vunpack.c.l.b16 %v123
    %v257 = vunpack.c.h.b16 %v123
    %v258 = vunpack.c.l.b16 %v124
    %v259 = vunpack.c.h.b16 %v124
    %v260 = vunpack.c.l.b16 %v125
    %v261 = vunpack.c.h.b16 %v125
    %v262 = vpack.c.b16 %v248, %v246
    %v263 = vpack.c.b16 %v249, %v247
    %v264 = vpack.c.b16 %v252, %v250
    %v265 = vpack.c.b16 %v253, %v251
    %v266 = vpack.c.b16 %v256, %v254
    %v267 = vpack.c.b16 %v257, %v255
    %v268 = vpack.c.b16 %v260, %v258
    %v269 = vpack.c.b16 %v261, %v259
    %vm278 = vcmask 523264
    %v280 = vsel %vm278, 0, 0
    %282 = vmatprep.subr.bf16.mxu0 0
    %283 = vmatpush1.bf16.msra.mxu0 0
    %284 = vmatprep.subr.bf16.mxu0 0
    %285 = vmatpush1.bf16.msra.mxu0 0
    %286 = vmatprep.subr.bf16.mxu0 0
    %287 = vmatpush1.bf16.msra.mxu0 0
    %288 = vmatprep.subr.bf16.mxu0 0
    %289 = vmatpush1.bf16.msra.mxu0 0
    %290 = vmatprep.subr.bf16.mxu0 %v269
    %291 = vmatpush1.bf16.msra.mxu0 %v268
    %292 = vmatprep.subr.bf16.mxu0 %v267
    %293 = vmatpush1.bf16.msra.mxu0 %v266
    %294 = vmatprep.subr.bf16.mxu0 %v265
    %295 = vmatpush1.bf16.msra.mxu0 %v264
    %296 = vmatprep.subr.bf16.mxu0 %v263
    %297 = vmatpush1.bf16.msra.mxu0 %v262
    %298 = vmatprep.subr.bf16.mxu0 0
    %299 = vmatpush2.bf16.msra.mxu0 0
    %300 = vmatprep.subr.bf16.mxu0 0
    %301 = vmatpush2.bf16.msra.mxu0 0
    %302 = vmatprep.subr.bf16.mxu0 0
    %303 = vmatpush2.bf16.msra.mxu0 0
    %304 = vmatprep.subr.bf16.mxu0 0
    %305 = vmatpush2.bf16.msra.mxu0 0
    %306 = vmatprep.subr.bf16.mxu0 0
    %307 = vmatpush2.bf16.msra.mxu0 0
    %308 = vmatprep.subr.bf16.mxu0 0
    %309 = vmatpush2.bf16.msra.mxu0 0
    %310 = vmatprep.subr.bf16.mxu0 0
    %311 = vmatpush2.bf16.msra.mxu0 0
    %312 = vmatprep.subr.bf16.mxu0 0
    %313 = vmatpush2.bf16.msra.mxu0 0
    %314 = vmatprep.mubr.bf16.mxu0 0
    %315 = vmatmul.mubr.bf16.gmra.mxu0 %v280
    %v316 = vpop.f32.mrf.mxu0
    %v317 = vadd.f32 0.0, %v316
    %v318 = vpop.f32.mrf.mxu0
    %v319 = vadd.f32 0.0, %v318
    %v320 = vpop.f32.mrf.mxu0
    %v321 = vpop.f32.mrf.mxu0
    %322 = vdwg.mxu0
    %v323 = vadd.f32 %v216, %v317
    %v324 = vadd.f32 %v217, %v319
    %v325 = vxor.u32 %v323, 2147483648
    %v326 = vxor.u32 %v324, 2147483648
    %v327 = vmul.f32 %v325, 1.442695
    %v328 = vpow.pop %v327
    %v329 = vmul.f32 %v326, 1.442695
    %v330 = vpow.pop %v329
    %v331 = vadd.f32 %v328, 1.0
    %v332 = vadd.f32 %v330, 1.0
    %v333 = vrcp.pop %v331
    %v334 = vmul.f32 1.0, %v333
    %v335 = vrcp.pop %v332
    %v336 = vmul.f32 1.0, %v335
    %v337 = vtanh.pop %v324
    %v338 = vmul.f32 %v334, 0.0
    %340 = vrot.lane.b32.xlu0 %v337, 64
    %v341 = vpop.permute.xlu0 %340
    %v343 = vmul.f32 %v334, %v341
    %345 = vrot.lane.b32.xlu0 %v343, 64
    %v346 = vpop.permute.xlu0 %345
    %v348 = vadd.f32 %v338, %v346
    %v349 = vtanh.pop %v348
    %351 = vrot.lane.b32.xlu0 %v349, 64
    %v352 = vpop.permute.xlu0 %351
    %v354 = vmul.f32 %v336, %v352
    %v355 = vpack.c.bf16 %v354, %v354
    %v357 = vsel %vm278, %v355, 0
    %359 = vmatprep.subr.bf16.mxu0 0
    %360 = vmatpush1.bf16.msra.mxu0 0
    %361 = vmatprep.subr.bf16.mxu0 0
    %362 = vmatpush1.bf16.msra.mxu0 0
    %363 = vmatprep.subr.bf16.mxu0 0
    %364 = vmatpush1.bf16.msra.mxu0 0
    %365 = vmatprep.subr.bf16.mxu0 0
    %366 = vmatpush1.bf16.msra.mxu0 0
    %367 = vmatprep.subr.bf16.mxu0 %v269
    %368 = vmatpush1.bf16.msra.mxu0 %v268
    %369 = vmatprep.subr.bf16.mxu0 %v267
    %370 = vmatpush1.bf16.msra.mxu0 %v266
    %371 = vmatprep.subr.bf16.mxu0 %v265
    %372 = vmatpush1.bf16.msra.mxu0 %v264
    %373 = vmatprep.subr.bf16.mxu0 %v263
    %374 = vmatpush1.bf16.msra.mxu0 %v262
    %375 = vmatprep.subr.bf16.mxu0 0
    %376 = vmatpush2.bf16.msra.mxu0 0
    %377 = vmatprep.subr.bf16.mxu0 0
    %378 = vmatpush2.bf16.msra.mxu0 0
    %379 = vmatprep.subr.bf16.mxu0 0
    %380 = vmatpush2.bf16.msra.mxu0 0
    %381 = vmatprep.subr.bf16.mxu0 0
    %382 = vmatpush2.bf16.msra.mxu0 0
    %383 = vmatprep.subr.bf16.mxu0 0
    %384 = vmatpush2.bf16.msra.mxu0 0
    %385 = vmatprep.subr.bf16.mxu0 0
    %386 = vmatpush2.bf16.msra.mxu0 0
    %387 = vmatprep.subr.bf16.mxu0 0
    %388 = vmatpush2.bf16.msra.mxu0 0
    %389 = vmatprep.subr.bf16.mxu0 0
    %390 = vmatpush2.bf16.msra.mxu0 0
    %391 = vmatprep.mubr.bf16.mxu0 0
    %392 = vmatmul.mubr.bf16.gmra.mxu0 %v357
    %v393 = vpop.f32.mrf.mxu0
    %v394 = vadd.f32 0.0, %v393
    %v395 = vpop.f32.mrf.mxu0
    %v396 = vadd.f32 0.0, %v395
    %v397 = vpop.f32.mrf.mxu0
    %v398 = vpop.f32.mrf.mxu0
    %399 = vdwg.mxu0
    %v402 = vrot.slane %v394, 6
    %v403 = vrot.slane %v396, 6
    %v406 = vadd.f32 %v222, %v402
    %v407 = vadd.f32 %v223, %v403
    %v408 = vxor.u32 %v406, 2147483648
    %v409 = vxor.u32 %v407, 2147483648
    %v410 = vmul.f32 %v408, 1.442695
    %v411 = vpow.pop %v410
    %v412 = vmul.f32 %v409, 1.442695
    %v413 = vpow.pop %v412
    %v414 = vadd.f32 %v411, 1.0
    %v415 = vadd.f32 %v413, 1.0
    %v416 = vrcp.pop %v414
    %v417 = vmul.f32 1.0, %v416
    %v418 = vrcp.pop %v415
    %v419 = vmul.f32 1.0, %v418
    %v420 = vtanh.pop %v407
    %v422 = vrot.slane %v348, 6
    %v424 = vmul.f32 %v417, %v422
    %426 = vrot.lane.b32.xlu0 %v420, 64
    %v427 = vpop.permute.xlu0 %426
    %v429 = vmul.f32 %v417, %v427
    %431 = vrot.lane.b32.xlu0 %v429, 64
    %v432 = vpop.permute.xlu0 %431
    %v434 = vadd.f32 %v424, %v432
    %v435 = vtanh.pop %v434
    %437 = vrot.lane.b32.xlu0 %v435, 64
    %v438 = vpop.permute.xlu0 %437
    %v440 = vmul.f32 %v419, %v438
    %v441 = vpack.c.bf16 %v440, %v440
    %v443 = vrot.slane %v441, 1
    %v445 = vsel %vm278, %v443, 0
    %447 = vmatprep.subr.bf16.mxu0 0
    %448 = vmatpush1.bf16.msra.mxu0 0
    %449 = vmatprep.subr.bf16.mxu0 0
    %450 = vmatpush1.bf16.msra.mxu0 0
    %451 = vmatprep.subr.bf16.mxu0 0
    %452 = vmatpush1.bf16.msra.mxu0 0
    %453 = vmatprep.subr.bf16.mxu0 0
    %454 = vmatpush1.bf16.msra.mxu0 0
    %455 = vmatprep.subr.bf16.mxu0 %v269
    %456 = vmatpush1.bf16.msra.mxu0 %v268
    %457 = vmatprep.subr.bf16.mxu0 %v267
    %458 = vmatpush1.bf16.msra.mxu0 %v266
    %459 = vmatprep.subr.bf16.mxu0 %v265
    %460 = vmatpush1.bf16.msra.mxu0 %v264
    %461 = vmatprep.subr.bf16.mxu0 %v263
    %462 = vmatpush1.bf16.msra.mxu0 %v262
    %463 = vmatprep.subr.bf16.mxu0 0
    %464 = vmatpush2.bf16.msra.mxu0 0
    %465 = vmatprep.subr.bf16.mxu0 0
    %466 = vmatpush2.bf16.msra.mxu0 0
    %467 = vmatprep.subr.bf16.mxu0 0
    %468 = vmatpush2.bf16.msra.mxu0 0
    %469 = vmatprep.subr.bf16.mxu0 0
    %470 = vmatpush2.bf16.msra.mxu0 0
    %471 = vmatprep.subr.bf16.mxu0 0
    %472 = vmatpush2.bf16.msra.mxu0 0
    %473 = vmatprep.subr.bf16.mxu0 0
    %474 = vmatpush2.bf16.msra.mxu0 0
    %475 = vmatprep.subr.bf16.mxu0 0
    %476 = vmatpush2.bf16.msra.mxu0 0
    %477 = vmatprep.subr.bf16.mxu0 0
    %478 = vmatpush2.bf16.msra.mxu0 0
    %479 = vmatprep.mubr.bf16.mxu0 0
    %480 = vmatmul.mubr.bf16.gmra.mxu0 %v445
    %v481 = vpop.f32.mrf.mxu0
    %v482 = vadd.f32 0.0, %v481
    %v483 = vpop.f32.mrf.mxu0
    %v484 = vadd.f32 0.0, %v483
    %v485 = vpop.f32.mrf.mxu0
    %v486 = vpop.f32.mrf.mxu0
    %487 = vdwg.mxu0
    %v490 = vrot.slane %v482, 4
    %v491 = vrot.slane %v484, 4
    %v494 = vadd.f32 %v216, %v490
    %v495 = vadd.f32 %v217, %v491
    %v496 = vxor.u32 %v494, 2147483648
    %v497 = vxor.u32 %v495, 2147483648
    %v498 = vmul.f32 %v496, 1.442695
    %v499 = vpow.pop %v498
    %v500 = vmul.f32 %v497, 1.442695
    %v501 = vpow.pop %v500
    %v502 = vadd.f32 %v499, 1.0
    %v503 = vadd.f32 %v501, 1.0
    %v504 = vrcp.pop %v502
    %v505 = vmul.f32 1.0, %v504
    %v506 = vrcp.pop %v503
    %v507 = vmul.f32 1.0, %v506
    %v508 = vtanh.pop %v495
    %v510 = vrot.slane %v434, 6
    %v512 = vmul.f32 %v505, %v510
    %514 = vrot.lane.b32.xlu0 %v508, 64
    %v515 = vpop.permute.xlu0 %514
    %v517 = vmul.f32 %v505, %v515
    %519 = vrot.lane.b32.xlu0 %v517, 64
    %v520 = vpop.permute.xlu0 %519
    %v522 = vadd.f32 %v512, %v520
    %v523 = vtanh.pop %v522
    %525 = vrot.lane.b32.xlu0 %v523, 64
    %v526 = vpop.permute.xlu0 %525
    %v528 = vmul.f32 %v507, %v526
    %v529 = vpack.c.bf16 %v528, %v528
    %v531 = vrot.slane %v529, 2
    %v533 = vsel %vm278, %v531, 0
    %535 = vmatprep.subr.bf16.mxu0 0
    %536 = vmatpush1.bf16.msra.mxu0 0
    %537 = vmatprep.subr.bf16.mxu0 0
    %538 = vmatpush1.bf16.msra.mxu0 0
    %539 = vmatprep.subr.bf16.mxu0 0
    %540 = vmatpush1.bf16.msra.mxu0 0
    %541 = vmatprep.subr.bf16.mxu0 0
    %542 = vmatpush1.bf16.msra.mxu0 0
    %543 = vmatprep.subr.bf16.mxu0 %v269
    %544 = vmatpush1.bf16.msra.mxu0 %v268
    %545 = vmatprep.subr.bf16.mxu0 %v267
    %546 = vmatpush1.bf16.msra.mxu0 %v266
    %547 = vmatprep.subr.bf16.mxu0 %v265
    %548 = vmatpush1.bf16.msra.mxu0 %v264
    %549 = vmatprep.subr.bf16.mxu0 %v263
    %550 = vmatpush1.bf16.msra.mxu0 %v262
    %551 = vmatprep.subr.bf16.mxu0 0
    %552 = vmatpush2.bf16.msra.mxu0 0
    %553 = vmatprep.subr.bf16.mxu0 0
    %554 = vmatpush2.bf16.msra.mxu0 0
    %555 = vmatprep.subr.bf16.mxu0 0
    %556 = vmatpush2.bf16.msra.mxu0 0
    %557 = vmatprep.subr.bf16.mxu0 0
    %558 = vmatpush2.bf16.msra.mxu0 0
    %559 = vmatprep.subr.bf16.mxu0 0
    %560 = vmatpush2.bf16.msra.mxu0 0
    %561 = vmatprep.subr.bf16.mxu0 0
    %562 = vmatpush2.bf16.msra.mxu0 0
    %563 = vmatprep.subr.bf16.mxu0 0
    %564 = vmatpush2.bf16.msra.mxu0 0
    %565 = vmatprep.subr.bf16.mxu0 0
    %566 = vmatpush2.bf16.msra.mxu0 0
    %567 = vmatprep.mubr.bf16.mxu0 0
    %568 = vmatmul.mubr.bf16.gmra.mxu0 %v533
    %v569 = vpop.f32.mrf.mxu0
    %v570 = vadd.f32 0.0, %v569
    %v571 = vpop.f32.mrf.mxu0
    %v572 = vadd.f32 0.0, %v571
    %v573 = vpop.f32.mrf.mxu0
    %v574 = vpop.f32.mrf.mxu0
    %575 = vdwg.mxu0
    %v578 = vrot.slane %v570, 2
    %v579 = vrot.slane %v572, 2
    %v582 = vadd.f32 %v222, %v578
    %v583 = vadd.f32 %v223, %v579
    %v584 = vxor.u32 %v582, 2147483648
    %v585 = vxor.u32 %v583, 2147483648
    %v586 = vmul.f32 %v584, 1.442695
    %v587 = vpow.pop %v586
    %v588 = vmul.f32 %v585, 1.442695
    %v589 = vpow.pop %v588
    %v590 = vadd.f32 %v587, 1.0
    %v591 = vadd.f32 %v589, 1.0
    %v592 = vrcp.pop %v590
    %v593 = vmul.f32 1.0, %v592
    %v594 = vrcp.pop %v591
    %v595 = vmul.f32 1.0, %v594
    %v596 = vtanh.pop %v583
    %v598 = vrot.slane %v522, 6
    %v600 = vmul.f32 %v593, %v598
    %602 = vrot.lane.b32.xlu0 %v596, 64
    %v603 = vpop.permute.xlu0 %602
    %v605 = vmul.f32 %v593, %v603
    %607 = vrot.lane.b32.xlu0 %v605, 64
    %v608 = vpop.permute.xlu0 %607
    %v610 = vadd.f32 %v600, %v608
    %v611 = vtanh.pop %v610
    %613 = vrot.lane.b32.xlu0 %v611, 64
    %v614 = vpop.permute.xlu0 %613
    %v616 = vmul.f32 %v595, %v614
    %v617 = vpack.c.bf16 %v616, %v616
    %v619 = vrot.slane %v617, 3
    %v621 = vsel %vm278, %v619, 0
    %623 = vmatprep.subr.bf16.mxu0 0
    %624 = vmatpush1.bf16.msra.mxu0 0
    %625 = vmatprep.subr.bf16.mxu0 0
    %626 = vmatpush1.bf16.msra.mxu0 0
    %627 = vmatprep.subr.bf16.mxu0 0
    %628 = vmatpush1.bf16.msra.mxu0 0
    %629 = vmatprep.subr.bf16.mxu0 0
    %630 = vmatpush1.bf16.msra.mxu0 0
    %631 = vmatprep.subr.bf16.mxu0 %v269
    %632 = vmatpush1.bf16.msra.mxu0 %v268
    %633 = vmatprep.subr.bf16.mxu0 %v267
    %634 = vmatpush1.bf16.msra.mxu0 %v266
    %635 = vmatprep.subr.bf16.mxu0 %v265
    %636 = vmatpush1.bf16.msra.mxu0 %v264
    %637 = vmatprep.subr.bf16.mxu0 %v263
    %638 = vmatpush1.bf16.msra.mxu0 %v262
    %639 = vmatprep.subr.bf16.mxu0 0
    %640 = vmatpush2.bf16.msra.mxu0 0
    %641 = vmatprep.subr.bf16.mxu0 0
    %642 = vmatpush2.bf16.msra.mxu0 0
    %643 = vmatprep.subr.bf16.mxu0 0
    %644 = vmatpush2.bf16.msra.mxu0 0
    %645 = vmatprep.subr.bf16.mxu0 0
    %646 = vmatpush2.bf16.msra.mxu0 0
    %647 = vmatprep.subr.bf16.mxu0 0
    %648 = vmatpush2.bf16.msra.mxu0 0
    %649 = vmatprep.subr.bf16.mxu0 0
    %650 = vmatpush2.bf16.msra.mxu0 0
    %651 = vmatprep.subr.bf16.mxu0 0
    %652 = vmatpush2.bf16.msra.mxu0 0
    %653 = vmatprep.subr.bf16.mxu0 0
    %654 = vmatpush2.bf16.msra.mxu0 0
    %655 = vmatprep.mubr.bf16.mxu0 0
    %656 = vmatmul.mubr.bf16.gmra.mxu0 %v621
    %v657 = vpop.f32.mrf.mxu0
    %v658 = vadd.f32 0.0, %v657
    %v659 = vpop.f32.mrf.mxu0
    %v660 = vadd.f32 0.0, %v659
    %v661 = vpop.f32.mrf.mxu0
    %v662 = vpop.f32.mrf.mxu0
    %663 = vdwg.mxu0
    %v664 = vadd.f32 %v230, %v658
    %v665 = vadd.f32 %v231, %v660
    %v666 = vxor.u32 %v664, 2147483648
    %v667 = vxor.u32 %v665, 2147483648
    %v668 = vmul.f32 %v666, 1.442695
    %v669 = vpow.pop %v668
    %v670 = vmul.f32 %v667, 1.442695
    %v671 = vpow.pop %v670
    %v672 = vadd.f32 %v669, 1.0
    %v673 = vadd.f32 %v671, 1.0
    %v674 = vrcp.pop %v672
    %v675 = vmul.f32 1.0, %v674
    %v676 = vrcp.pop %v673
    %v677 = vmul.f32 1.0, %v676
    %v678 = vtanh.pop %v665
    %v680 = vrot.slane %v610, 6
    %v682 = vmul.f32 %v675, %v680
    %684 = vrot.lane.b32.xlu0 %v678, 64
    %v685 = vpop.permute.xlu0 %684
    %v687 = vmul.f32 %v675, %v685
    %689 = vrot.lane.b32.xlu0 %v687, 64
    %v690 = vpop.permute.xlu0 %689
    %v692 = vadd.f32 %v682, %v690
    %v693 = vtanh.pop %v692
    %695 = vrot.lane.b32.xlu0 %v693, 64
    %v696 = vpop.permute.xlu0 %695
    %v698 = vmul.f32 %v677, %v696
    %v699 = vpack.c.bf16 %v698, %v698
    %v701 = vsel %vm278, %v699, 0
    %703 = vmatprep.subr.bf16.mxu0 0
    %704 = vmatpush1.bf16.msra.mxu0 0
    %705 = vmatprep.subr.bf16.mxu0 0
    %706 = vmatpush1.bf16.msra.mxu0 0
    %707 = vmatprep.subr.bf16.mxu0 0
    %708 = vmatpush1.bf16.msra.mxu0 0
    %709 = vmatprep.subr.bf16.mxu0 0
    %710 = vmatpush1.bf16.msra.mxu0 0
    %711 = vmatprep.subr.bf16.mxu0 %v269
    %712 = vmatpush1.bf16.msra.mxu0 %v268
    %713 = vmatprep.subr.bf16.mxu0 %v267
    %714 = vmatpush1.bf16.msra.mxu0 %v266
    %715 = vmatprep.subr.bf16.mxu0 %v265
    %716 = vmatpush1.bf16.msra.mxu0 %v264
    %717 = vmatprep.subr.bf16.mxu0 %v263
    %718 = vmatpush1.bf16.msra.mxu0 %v262
    %719 = vmatprep.subr.bf16.mxu0 0
    %720 = vmatpush2.bf16.msra.mxu0 0
    %721 = vmatprep.subr.bf16.mxu0 0
    %722 = vmatpush2.bf16.msra.mxu0 0
    %723 = vmatprep.subr.bf16.mxu0 0
    %724 = vmatpush2.bf16.msra.mxu0 0
    %725 = vmatprep.subr.bf16.mxu0 0
    %726 = vmatpush2.bf16.msra.mxu0 0
    %727 = vmatprep.subr.bf16.mxu0 0
    %728 = vmatpush2.bf16.msra.mxu0 0
    %729 = vmatprep.subr.bf16.mxu0 0
    %730 = vmatpush2.bf16.msra.mxu0 0
    %731 = vmatprep.subr.bf16.mxu0 0
    %732 = vmatpush2.bf16.msra.mxu0 0
    %733 = vmatprep.subr.bf16.mxu0 0
    %734 = vmatpush2.bf16.msra.mxu0 0
    %735 = vmatprep.mubr.bf16.mxu0 0
    %736 = vmatmul.mubr.bf16.gmra.mxu0 %v701
    %v737 = vpop.f32.mrf.mxu0
    %v738 = vadd.f32 0.0, %v737
    %v739 = vpop.f32.mrf.mxu0
    %v740 = vadd.f32 0.0, %v739
    %v741 = vpop.f32.mrf.mxu0
    %v742 = vpop.f32.mrf.mxu0
    %743 = vdwg.mxu0
    %v746 = vrot.slane %v738, 6
    %v747 = vrot.slane %v740, 6
    %v750 = vadd.f32 %v236, %v746
    %v751 = vadd.f32 %v237, %v747
    %v752 = vxor.u32 %v750, 2147483648
    %v753 = vxor.u32 %v751, 2147483648
    %v754 = vmul.f32 %v752, 1.442695
    %v755 = vpow.pop %v754
    %v756 = vmul.f32 %v753, 1.442695
    %v757 = vpow.pop %v756
    %v758 = vadd.f32 %v755, 1.0
    %v759 = vadd.f32 %v757, 1.0
    %v760 = vrcp.pop %v758
    %v761 = vmul.f32 1.0, %v760
    %v762 = vrcp.pop %v759
    %v763 = vmul.f32 1.0, %v762
    %v764 = vtanh.pop %v751
    %v766 = vrot.slane %v692, 6
    %v768 = vmul.f32 %v761, %v766
    %770 = vrot.lane.b32.xlu0 %v764, 64
    %v771 = vpop.permute.xlu0 %770
    %v773 = vmul.f32 %v761, %v771
    %775 = vrot.lane.b32.xlu0 %v773, 64
    %v776 = vpop.permute.xlu0 %775
    %v778 = vadd.f32 %v768, %v776
    %v779 = vtanh.pop %v778
    %781 = vrot.lane.b32.xlu0 %v779, 64
    %v782 = vpop.permute.xlu0 %781
    %v784 = vmul.f32 %v763, %v782
    %v785 = vpack.c.bf16 %v784, %v784
    %v787 = vrot.slane %v785, 1
    %v789 = vsel %vm278, %v787, 0
    %791 = vmatprep.subr.bf16.mxu0 0
    %792 = vmatpush1.bf16.msra.mxu0 0
    %793 = vmatprep.subr.bf16.mxu0 0
    %794 = vmatpush1.bf16.msra.mxu0 0
    %795 = vmatprep.subr.bf16.mxu0 0
    %796 = vmatpush1.bf16.msra.mxu0 0
    %797 = vmatprep.subr.bf16.mxu0 0
    %798 = vmatpush1.bf16.msra.mxu0 0
    %799 = vmatprep.subr.bf16.mxu0 %v269
    %800 = vmatpush1.bf16.msra.mxu0 %v268
    %801 = vmatprep.subr.bf16.mxu0 %v267
    %802 = vmatpush1.bf16.msra.mxu0 %v266
    %803 = vmatprep.subr.bf16.mxu0 %v265
    %804 = vmatpush1.bf16.msra.mxu0 %v264
    %805 = vmatprep.subr.bf16.mxu0 %v263
    %806 = vmatpush1.bf16.msra.mxu0 %v262
    %807 = vmatprep.subr.bf16.mxu0 0
    %808 = vmatpush2.bf16.msra.mxu0 0
    %809 = vmatprep.subr.bf16.mxu0 0
    %810 = vmatpush2.bf16.msra.mxu0 0
    %811 = vmatprep.subr.bf16.mxu0 0
    %812 = vmatpush2.bf16.msra.mxu0 0
    %813 = vmatprep.subr.bf16.mxu0 0
    %814 = vmatpush2.bf16.msra.mxu0 0
    %815 = vmatprep.subr.bf16.mxu0 0
    %816 = vmatpush2.bf16.msra.mxu0 0
    %817 = vmatprep.subr.bf16.mxu0 0
    %818 = vmatpush2.bf16.msra.mxu0 0
    %819 = vmatprep.subr.bf16.mxu0 0
    %820 = vmatpush2.bf16.msra.mxu0 0
    %821 = vmatprep.subr.bf16.mxu0 0
    %822 = vmatpush2.bf16.msra.mxu0 0
    %823 = vmatprep.mubr.bf16.mxu0 0
    %824 = vmatmul.mubr.bf16.gmra.mxu0 %v789
    %v825 = vpop.f32.mrf.mxu0
    %v826 = vadd.f32 0.0, %v825
    %v827 = vpop.f32.mrf.mxu0
    %v828 = vadd.f32 0.0, %v827
    %v829 = vpop.f32.mrf.mxu0
    %v830 = vpop.f32.mrf.mxu0
    %831 = vdwg.mxu0
    %v834 = vrot.slane %v826, 4
    %v835 = vrot.slane %v828, 4
    %v838 = vadd.f32 %v230, %v834
    %v839 = vadd.f32 %v231, %v835
    %v840 = vxor.u32 %v838, 2147483648
    %v841 = vxor.u32 %v839, 2147483648
    %v842 = vmul.f32 %v840, 1.442695
    %v843 = vpow.pop %v842
    %v844 = vmul.f32 %v841, 1.442695
    %v845 = vpow.pop %v844
    %v846 = vadd.f32 %v843, 1.0
    %v847 = vadd.f32 %v845, 1.0
    %v848 = vrcp.pop %v846
    %v849 = vmul.f32 1.0, %v848
    %v850 = vrcp.pop %v847
    %v851 = vmul.f32 1.0, %v850
    %v852 = vtanh.pop %v839
    %v854 = vrot.slane %v778, 6
    %v856 = vmul.f32 %v849, %v854
    %858 = vrot.lane.b32.xlu0 %v852, 64
    %v859 = vpop.permute.xlu0 %858
    %v861 = vmul.f32 %v849, %v859
    %863 = vrot.lane.b32.xlu0 %v861, 64
    %v864 = vpop.permute.xlu0 %863
    %v866 = vadd.f32 %v856, %v864
    %v867 = vtanh.pop %v866
    %869 = vrot.lane.b32.xlu0 %v867, 64
    %v870 = vpop.permute.xlu0 %869
    %v872 = vmul.f32 %v851, %v870
    %v873 = vpack.c.bf16 %v872, %v872
    %v875 = vrot.slane %v873, 2
    %v877 = vsel %vm278, %v875, 0
    %879 = vmatprep.subr.bf16.mxu0 0
    %880 = vmatpush1.bf16.msra.mxu0 0
    %881 = vmatprep.subr.bf16.mxu0 0
    %882 = vmatpush1.bf16.msra.mxu0 0
    %883 = vmatprep.subr.bf16.mxu0 0
    %884 = vmatpush1.bf16.msra.mxu0 0
    %885 = vmatprep.subr.bf16.mxu0 0
    %886 = vmatpush1.bf16.msra.mxu0 0
    %887 = vmatprep.subr.bf16.mxu0 %v269
    %888 = vmatpush1.bf16.msra.mxu0 %v268
    %889 = vmatprep.subr.bf16.mxu0 %v267
    %890 = vmatpush1.bf16.msra.mxu0 %v266
    %891 = vmatprep.subr.bf16.mxu0 %v265
    %892 = vmatpush1.bf16.msra.mxu0 %v264
    %893 = vmatprep.subr.bf16.mxu0 %v263
    %894 = vmatpush1.bf16.msra.mxu0 %v262
    %895 = vmatprep.subr.bf16.mxu0 0
    %896 = vmatpush2.bf16.msra.mxu0 0
    %897 = vmatprep.subr.bf16.mxu0 0
    %898 = vmatpush2.bf16.msra.mxu0 0
    %899 = vmatprep.subr.bf16.mxu0 0
    %900 = vmatpush2.bf16.msra.mxu0 0
    %901 = vmatprep.subr.bf16.mxu0 0
    %902 = vmatpush2.bf16.msra.mxu0 0
    %903 = vmatprep.subr.bf16.mxu0 0
    %904 = vmatpush2.bf16.msra.mxu0 0
    %905 = vmatprep.subr.bf16.mxu0 0
    %906 = vmatpush2.bf16.msra.mxu0 0
    %907 = vmatprep.subr.bf16.mxu0 0
    %908 = vmatpush2.bf16.msra.mxu0 0
    %909 = vmatprep.subr.bf16.mxu0 0
    %910 = vmatpush2.bf16.msra.mxu0 0
    %911 = vmatprep.mubr.bf16.mxu0 0
    %912 = vmatmul.mubr.bf16.gmra.mxu0 %v877
    %v913 = vpop.f32.mrf.mxu0
    %v914 = vadd.f32 0.0, %v913
    %v915 = vpop.f32.mrf.mxu0
    %v916 = vadd.f32 0.0, %v915
    %v917 = vpop.f32.mrf.mxu0
    %v918 = vpop.f32.mrf.mxu0
    %919 = vdwg.mxu0
    %v922 = vrot.slane %v914, 2
    %v923 = vrot.slane %v916, 2
    %v926 = vadd.f32 %v236, %v922
    %v927 = vadd.f32 %v237, %v923
    %v928 = vxor.u32 %v926, 2147483648
    %v929 = vxor.u32 %v927, 2147483648
    %v930 = vmul.f32 %v928, 1.442695
    %v931 = vpow.pop %v930
    %v932 = vmul.f32 %v929, 1.442695
    %v933 = vpow.pop %v932
    %v934 = vadd.f32 %v931, 1.0
    %v935 = vadd.f32 %v933, 1.0
    %v936 = vrcp.pop %v934
    %v937 = vmul.f32 1.0, %v936
    %v938 = vrcp.pop %v935
    %v939 = vmul.f32 1.0, %v938
    %v940 = vtanh.pop %v927
    %v942 = vrot.slane %v866, 6
    %v944 = vmul.f32 %v937, %v942
    %946 = vrot.lane.b32.xlu0 %v940, 64
    %v947 = vpop.permute.xlu0 %946
    %v949 = vmul.f32 %v937, %v947
    %951 = vrot.lane.b32.xlu0 %v949, 64
    %v952 = vpop.permute.xlu0 %951
    %v954 = vadd.f32 %v944, %v952
    %v955 = vtanh.pop %v954
    %957 = vrot.lane.b32.xlu0 %v955, 64
    %v958 = vpop.permute.xlu0 %957
    %v960 = vmul.f32 %v939, %v958
    %vm961 = vcmask 261126
    %962 = vst.msk [vmem:[#allocation10 - $0x6] sm:$0xc0] %vm961, %v960
    %964 = vrot.lane.b32.xlu0 %v960, 96
    %v965 = vpop.permute.xlu0 %964
    %s967 = scalar_lea.vmem [#allocation10], 2
    %968 = vst.msk [vmem:[%s967 - $0x6] sm:$0xc0] %vm961, %v965
    %970 = vrot.lane.b32.xlu0 %v954, 64
    %v971 = vpop.permute.xlu0 %970
    %973 = vst.msk [vmem:[#allocation11 - $0x6] sm:$0xc0] %vm961, %v971
    %974 = vrot.lane.b32.xlu0 %v954, 32
    %v975 = vpop.permute.xlu0 %974
    %s977 = scalar_lea.vmem [#allocation11], 2
    %978 = vst.msk [vmem:[%s977 - $0x6] sm:$0xc0] %vm961, %v975
    %v979 = vrot.slane %v960, 6
    %v981 = vsel %vm111, %v354, %v979
    %v983 = vrot.slane %v872, 2
    %v985 = vsel %vm111, %v440, %v983
    %v987 = vrot.slane %v784, 6
    %v989 = vsel %vm111, %v528, %v987
    %v991 = vrot.slane %v698, 2
    %v993 = vsel %vm111, %v616, %v991
    %v995 = vrot.slane %v616, 6
    %v997 = vsel %vm111, %v698, %v995
    %v999 = vrot.slane %v528, 2
    %v1001 = vsel %vm111, %v784, %v999
    %v1003 = vrot.slane %v440, 6
    %v1005 = vsel %vm111, %v872, %v1003
    %v1007 = vrot.slane %v354, 2
    %v1009 = vsel %vm111, %v960, %v1007
    %vm1010 = vcmask 1041408
    %v1011 = vsel %vm1010, %v981, %v985
    %vm1012 = vcmask 1043456
    %v1013 = vsel %vm1012, %v1011, %v989
    %vm1014 = vcmask 1045504
    %v1015 = vsel %vm1014, %v1013, %v993
    %v1016 = vsel %vm1010, %v997, %v1001
    %v1017 = vsel %vm1012, %v1016, %v1005
    %v1018 = vsel %vm1014, %v1017, %v1009
    %v1019 = vpack.c.bf16 %v1018, %v1015
    %v1020 = vld [vmem:[%s4] sm:$0xff]
    %v1021 = vld [vmem:[%s4 + $0x8] sm:$0xff]
    %v1022 = vld [vmem:[%s4 + $0x10] sm:$0xff]
    %v1023 = vld [vmem:[%s4 + $0x18] sm:$0xff]
    %v1024 = vld [vmem:[%s4 + $0x20] sm:$0xff]
    %v1025 = vld [vmem:[%s4 + $0x28] sm:$0xff]
    %v1026 = vld [vmem:[%s4 + $0x30] sm:$0xff]
    %v1027 = vld [vmem:[%s4 + $0x38] sm:$0xff]
    %v1028 = vld [vmem:[#allocation7] sm:$0xff]
    %v1029 = vld [vmem:[#allocation7 + $0x8] sm:$0xff]
    %v1030 = vld [vmem:[#allocation7 + $0x10] sm:$0xff]
    %v1031 = vld [vmem:[#allocation7 + $0x18] sm:$0xff]
    %v1032 = vld [vmem:[#allocation7 + $0x20] sm:$0xff]
    %v1033 = vld [vmem:[#allocation7 + $0x28] sm:$0xff]
    %v1034 = vld [vmem:[#allocation7 + $0x30] sm:$0xff]
    %v1035 = vld [vmem:[#allocation7 + $0x38] sm:$0xff]
    %v1036 = vld [vmem:[#allocation8] sm:$0x3]
    %v1038 = vlaneseq
    %v1039 = vshrl.u32 %v1038, 7
    %v1040 = vsub.s32 0, %v1039
    %v1041 = vrot.slane %v1036, %v1040
    %v1042 = vlaneseq
    %v1043 = vshrl.u32 %v1042, 7
    %v1044 = vsub.s32 1, %v1043
    %v1045 = vrot.slane %v1036, %v1044
    %v1056 = vunpack.c.l.b16 %v1020
    %v1057 = vunpack.c.h.b16 %v1020
    %v1058 = vunpack.c.l.b16 %v1021
    %v1059 = vunpack.c.h.b16 %v1021
    %v1060 = vunpack.c.l.b16 %v1022
    %v1061 = vunpack.c.h.b16 %v1022
    %v1062 = vunpack.c.l.b16 %v1023
    %v1063 = vunpack.c.h.b16 %v1023
    %v1064 = vunpack.c.l.b16 %v1024
    %v1065 = vunpack.c.h.b16 %v1024
    %v1066 = vunpack.c.l.b16 %v1025
    %v1067 = vunpack.c.h.b16 %v1025
    %v1068 = vunpack.c.l.b16 %v1026
    %v1069 = vunpack.c.h.b16 %v1026
    %v1070 = vunpack.c.l.b16 %v1027
    %v1071 = vunpack.c.h.b16 %v1027
    %v1072 = vpack.c.b16 %v1058, %v1056
    %v1073 = vpack.c.b16 %v1059, %v1057
    %v1074 = vpack.c.b16 %v1062, %v1060
    %v1075 = vpack.c.b16 %v1063, %v1061
    %v1076 = vpack.c.b16 %v1066, %v1064
    %v1077 = vpack.c.b16 %v1067, %v1065
    %v1078 = vpack.c.b16 %v1070, %v1068
    %v1079 = vpack.c.b16 %v1071, %v1069
    %v1089 = vsel %vm278, %v1019, 0
    %1091 = vmatprep.subr.bf16.mxu0 0
    %1092 = vmatpush1.bf16.msra.mxu0 0
    %1093 = vmatprep.subr.bf16.mxu0 0
    %1094 = vmatpush1.bf16.msra.mxu0 0
    %1095 = vmatprep.subr.bf16.mxu0 0
    %1096 = vmatpush1.bf16.msra.mxu0 0
    %1097 = vmatprep.subr.bf16.mxu0 0
    %1098 = vmatpush1.bf16.msra.mxu0 0
    %1099 = vmatprep.subr.bf16.mxu0 %v1079
    %1100 = vmatpush1.bf16.msra.mxu0 %v1078
    %1101 = vmatprep.subr.bf16.mxu0 %v1077
    %1102 = vmatpush1.bf16.msra.mxu0 %v1076
    %1103 = vmatprep.subr.bf16.mxu0 %v1075
    %1104 = vmatpush1.bf16.msra.mxu0 %v1074
    %1105 = vmatprep.subr.bf16.mxu0 %v1073
    %1106 = vmatpush1.bf16.msra.mxu0 %v1072
    %1107 = vmatprep.subr.bf16.mxu0 0
    %1108 = vmatpush2.bf16.msra.mxu0 0
    %1109 = vmatprep.subr.bf16.mxu0 0
    %1110 = vmatpush2.bf16.msra.mxu0 0
    %1111 = vmatprep.subr.bf16.mxu0 0
    %1112 = vmatpush2.bf16.msra.mxu0 0
    %1113 = vmatprep.subr.bf16.mxu0 0
    %1114 = vmatpush2.bf16.msra.mxu0 0
    %1115 = vmatprep.subr.bf16.mxu0 0
    %1116 = vmatpush2.bf16.msra.mxu0 0
    %1117 = vmatprep.subr.bf16.mxu0 0
    %1118 = vmatpush2.bf16.msra.mxu0 0
    %1119 = vmatprep.subr.bf16.mxu0 0
    %1120 = vmatpush2.bf16.msra.mxu0 0
    %1121 = vmatprep.subr.bf16.mxu0 0
    %1122 = vmatpush2.bf16.msra.mxu0 0
    %1123 = vmatprep.mubr.bf16.mxu0 0
    %1124 = vmatmul.mubr.bf16.gmra.mxu0 %v1089
    %v1125 = vpop.f32.mrf.mxu0
    %v1126 = vadd.f32 %v1041, %v1125
    %v1127 = vpop.f32.mrf.mxu0
    %v1128 = vadd.f32 %v1045, %v1127
    %v1129 = vpop.f32.mrf.mxu0
    %v1130 = vadd.f32 %v1041, %v1129
    %v1131 = vpop.f32.mrf.mxu0
    %v1132 = vadd.f32 %v1045, %v1131
    %1133 = vdwg.mxu0
    %v1136 = vrot.slane %v1130, 6
    %v1137 = vrot.slane %v1132, 6
    %v1140 = vsel %vm109, %v1126, %v1136
    %v1141 = vsel %vm110, %v1128, %v1137
    %v1142 = vrot.slane %v1130, 2
    %v1143 = vrot.slane %v1132, 2
    %v1146 = vsel %vm109, %v1126, %v1142
    %v1147 = vsel %vm110, %v1128, %v1143
    %v1150 = vrot.slane %v1126, 6
    %v1151 = vrot.slane %v1128, 6
    %v1154 = vsel %vm109, %v1130, %v1150
    %v1155 = vsel %vm110, %v1132, %v1151
    %v1156 = vrot.slane %v1126, 2
    %v1157 = vrot.slane %v1128, 2
    %v1160 = vsel %vm109, %v1130, %v1156
    %v1161 = vsel %vm110, %v1132, %v1157
    %v1170 = vunpack.c.l.b16 %v1028
    %v1171 = vunpack.c.h.b16 %v1028
    %v1172 = vunpack.c.l.b16 %v1029
    %v1173 = vunpack.c.h.b16 %v1029
    %v1174 = vunpack.c.l.b16 %v1030
    %v1175 = vunpack.c.h.b16 %v1030
    %v1176 = vunpack.c.l.b16 %v1031
    %v1177 = vunpack.c.h.b16 %v1031
    %v1178 = vunpack.c.l.b16 %v1032
    %v1179 = vunpack.c.h.b16 %v1032
    %v1180 = vunpack.c.l.b16 %v1033
    %v1181 = vunpack.c.h.b16 %v1033
    %v1182 = vunpack.c.l.b16 %v1034
    %v1183 = vunpack.c.h.b16 %v1034
    %v1184 = vunpack.c.l.b16 %v1035
    %v1185 = vunpack.c.h.b16 %v1035
    %v1186 = vpack.c.b16 %v1172, %v1170
    %v1187 = vpack.c.b16 %v1173, %v1171
    %v1188 = vpack.c.b16 %v1176, %v1174
    %v1189 = vpack.c.b16 %v1177, %v1175
    %v1190 = vpack.c.b16 %v1180, %v1178
    %v1191 = vpack.c.b16 %v1181, %v1179
    %v1192 = vpack.c.b16 %v1184, %v1182
    %v1193 = vpack.c.b16 %v1185, %v1183
    %1202 = vmatprep.subr.bf16.mxu0 0
    %1203 = vmatpush1.bf16.msra.mxu0 0
    %1204 = vmatprep.subr.bf16.mxu0 0
    %1205 = vmatpush1.bf16.msra.mxu0 0
    %1206 = vmatprep.subr.bf16.mxu0 0
    %1207 = vmatpush1.bf16.msra.mxu0 0
    %1208 = vmatprep.subr.bf16.mxu0 0
    %1209 = vmatpush1.bf16.msra.mxu0 0
    %1210 = vmatprep.subr.bf16.mxu0 %v1193
    %1211 = vmatpush1.bf16.msra.mxu0 %v1192
    %1212 = vmatprep.subr.bf16.mxu0 %v1191
    %1213 = vmatpush1.bf16.msra.mxu0 %v1190
    %1214 = vmatprep.subr.bf16.mxu0 %v1189
    %1215 = vmatpush1.bf16.msra.mxu0 %v1188
    %1216 = vmatprep.subr.bf16.mxu0 %v1187
    %1217 = vmatpush1.bf16.msra.mxu0 %v1186
    %1218 = vmatprep.subr.bf16.mxu0 0
    %1219 = vmatpush2.bf16.msra.mxu0 0
    %1220 = vmatprep.subr.bf16.mxu0 0
    %1221 = vmatpush2.bf16.msra.mxu0 0
    %1222 = vmatprep.subr.bf16.mxu0 0
    %1223 = vmatpush2.bf16.msra.mxu0 0
    %1224 = vmatprep.subr.bf16.mxu0 0
    %1225 = vmatpush2.bf16.msra.mxu0 0
    %1226 = vmatprep.subr.bf16.mxu0 0
    %1227 = vmatpush2.bf16.msra.mxu0 0
    %1228 = vmatprep.subr.bf16.mxu0 0
    %1229 = vmatpush2.bf16.msra.mxu0 0
    %1230 = vmatprep.subr.bf16.mxu0 0
    %1231 = vmatpush2.bf16.msra.mxu0 0
    %1232 = vmatprep.subr.bf16.mxu0 0
    %1233 = vmatpush2.bf16.msra.mxu0 0
    %1234 = vmatprep.mubr.bf16.mxu0 0
    %1235 = vmatmul.mubr.bf16.gmra.mxu0 %v280
    %v1236 = vpop.f32.mrf.mxu0
    %v1237 = vadd.f32 0.0, %v1236
    %v1238 = vpop.f32.mrf.mxu0
    %v1239 = vadd.f32 0.0, %v1238
    %v1240 = vpop.f32.mrf.mxu0
    %v1241 = vpop.f32.mrf.mxu0
    %1242 = vdwg.mxu0
    %v1243 = vadd.f32 %v1140, %v1237
    %v1244 = vadd.f32 %v1141, %v1239
    %v1245 = vxor.u32 %v1243, 2147483648
    %v1246 = vxor.u32 %v1244, 2147483648
    %v1247 = vmul.f32 %v1245, 1.442695
    %v1248 = vpow.pop %v1247
    %v1249 = vmul.f32 %v1246, 1.442695
    %v1250 = vpow.pop %v1249
    %v1251 = vadd.f32 %v1248, 1.0
    %v1252 = vadd.f32 %v1250, 1.0
    %v1253 = vrcp.pop %v1251
    %v1254 = vmul.f32 1.0, %v1253
    %v1255 = vrcp.pop %v1252
    %v1256 = vmul.f32 1.0, %v1255
    %v1257 = vtanh.pop %v1244
    %v1258 = vmul.f32 %v1254, 0.0
    %1260 = vrot.lane.b32.xlu0 %v1257, 64
    %v1261 = vpop.permute.xlu0 %1260
    %v1263 = vmul.f32 %v1254, %v1261
    %1265 = vrot.lane.b32.xlu0 %v1263, 64
    %v1266 = vpop.permute.xlu0 %1265
    %v1268 = vadd.f32 %v1258, %v1266
    %v1269 = vtanh.pop %v1268
    %1271 = vrot.lane.b32.xlu0 %v1269, 64
    %v1272 = vpop.permute.xlu0 %1271
    %v1274 = vmul.f32 %v1256, %v1272
    %v1275 = vpack.c.bf16 %v1274, %v1274
    %v1277 = vsel %vm278, %v1275, 0
    %1279 = vmatprep.subr.bf16.mxu0 0
    %1280 = vmatpush1.bf16.msra.mxu0 0
    %1281 = vmatprep.subr.bf16.mxu0 0
    %1282 = vmatpush1.bf16.msra.mxu0 0
    %1283 = vmatprep.subr.bf16.mxu0 0
    %1284 = vmatpush1.bf16.msra.mxu0 0
    %1285 = vmatprep.subr.bf16.mxu0 0
    %1286 = vmatpush1.bf16.msra.mxu0 0
    %1287 = vmatprep.subr.bf16.mxu0 %v1193
    %1288 = vmatpush1.bf16.msra.mxu0 %v1192
    %1289 = vmatprep.subr.bf16.mxu0 %v1191
    %1290 = vmatpush1.bf16.msra.mxu0 %v1190
    %1291 = vmatprep.subr.bf16.mxu0 %v1189
    %1292 = vmatpush1.bf16.msra.mxu0 %v1188
    %1293 = vmatprep.subr.bf16.mxu0 %v1187
    %1294 = vmatpush1.bf16.msra.mxu0 %v1186
    %1295 = vmatprep.subr.bf16.mxu0 0
    %1296 = vmatpush2.bf16.msra.mxu0 0
    %1297 = vmatprep.subr.bf16.mxu0 0
    %1298 = vmatpush2.bf16.msra.mxu0 0
    %1299 = vmatprep.subr.bf16.mxu0 0
    %1300 = vmatpush2.bf16.msra.mxu0 0
    %1301 = vmatprep.subr.bf16.mxu0 0
    %1302 = vmatpush2.bf16.msra.mxu0 0
    %1303 = vmatprep.subr.bf16.mxu0 0
    %1304 = vmatpush2.bf16.msra.mxu0 0
    %1305 = vmatprep.subr.bf16.mxu0 0
    %1306 = vmatpush2.bf16.msra.mxu0 0
    %1307 = vmatprep.subr.bf16.mxu0 0
    %1308 = vmatpush2.bf16.msra.mxu0 0
    %1309 = vmatprep.subr.bf16.mxu0 0
    %1310 = vmatpush2.bf16.msra.mxu0 0
    %1311 = vmatprep.mubr.bf16.mxu0 0
    %1312 = vmatmul.mubr.bf16.gmra.mxu0 %v1277
    %v1313 = vpop.f32.mrf.mxu0
    %v1314 = vadd.f32 0.0, %v1313
    %v1315 = vpop.f32.mrf.mxu0
    %v1316 = vadd.f32 0.0, %v1315
    %v1317 = vpop.f32.mrf.mxu0
    %v1318 = vpop.f32.mrf.mxu0
    %1319 = vdwg.mxu0
    %v1322 = vrot.slane %v1314, 6
    %v1323 = vrot.slane %v1316, 6
    %v1326 = vadd.f32 %v1146, %v1322
    %v1327 = vadd.f32 %v1147, %v1323
    %v1328 = vxor.u32 %v1326, 2147483648
    %v1329 = vxor.u32 %v1327, 2147483648
    %v1330 = vmul.f32 %v1328, 1.442695
    %v1331 = vpow.pop %v1330
    %v1332 = vmul.f32 %v1329, 1.442695
    %v1333 = vpow.pop %v1332
    %v1334 = vadd.f32 %v1331, 1.0
    %v1335 = vadd.f32 %v1333, 1.0
    %v1336 = vrcp.pop %v1334
    %v1337 = vmul.f32 1.0, %v1336
    %v1338 = vrcp.pop %v1335
    %v1339 = vmul.f32 1.0, %v1338
    %v1340 = vtanh.pop %v1327
    %v1342 = vrot.slane %v1268, 6
    %v1344 = vmul.f32 %v1337, %v1342
    %1346 = vrot.lane.b32.xlu0 %v1340, 64
    %v1347 = vpop.permute.xlu0 %1346
    %v1349 = vmul.f32 %v1337, %v1347
    %1351 = vrot.lane.b32.xlu0 %v1349, 64
    %v1352 = vpop.permute.xlu0 %1351
    %v1354 = vadd.f32 %v1344, %v1352
    %v1355 = vtanh.pop %v1354
    %1357 = vrot.lane.b32.xlu0 %v1355, 64
    %v1358 = vpop.permute.xlu0 %1357
    %v1360 = vmul.f32 %v1339, %v1358
    %v1361 = vpack.c.bf16 %v1360, %v1360
    %v1363 = vrot.slane %v1361, 1
    %v1365 = vsel %vm278, %v1363, 0
    %1367 = vmatprep.subr.bf16.mxu0 0
    %1368 = vmatpush1.bf16.msra.mxu0 0
    %1369 = vmatprep.subr.bf16.mxu0 0
    %1370 = vmatpush1.bf16.msra.mxu0 0
    %1371 = vmatprep.subr.bf16.mxu0 0
    %1372 = vmatpush1.bf16.msra.mxu0 0
    %1373 = vmatprep.subr.bf16.mxu0 0
    %1374 = vmatpush1.bf16.msra.mxu0 0
    %1375 = vmatprep.subr.bf16.mxu0 %v1193
    %1376 = vmatpush1.bf16.msra.mxu0 %v1192
    %1377 = vmatprep.subr.bf16.mxu0 %v1191
    %1378 = vmatpush1.bf16.msra.mxu0 %v1190
    %1379 = vmatprep.subr.bf16.mxu0 %v1189
    %1380 = vmatpush1.bf16.msra.mxu0 %v1188
    %1381 = vmatprep.subr.bf16.mxu0 %v1187
    %1382 = vmatpush1.bf16.msra.mxu0 %v1186
    %1383 = vmatprep.subr.bf16.mxu0 0
    %1384 = vmatpush2.bf16.msra.mxu0 0
    %1385 = vmatprep.subr.bf16.mxu0 0
    %1386 = vmatpush2.bf16.msra.mxu0 0
    %1387 = vmatprep.subr.bf16.mxu0 0
    %1388 = vmatpush2.bf16.msra.mxu0 0
    %1389 = vmatprep.subr.bf16.mxu0 0
    %1390 = vmatpush2.bf16.msra.mxu0 0
    %1391 = vmatprep.subr.bf16.mxu0 0
    %1392 = vmatpush2.bf16.msra.mxu0 0
    %1393 = vmatprep.subr.bf16.mxu0 0
    %1394 = vmatpush2.bf16.msra.mxu0 0
    %1395 = vmatprep.subr.bf16.mxu0 0
    %1396 = vmatpush2.bf16.msra.mxu0 0
    %1397 = vmatprep.subr.bf16.mxu0 0
    %1398 = vmatpush2.bf16.msra.mxu0 0
    %1399 = vmatprep.mubr.bf16.mxu0 0
    %1400 = vmatmul.mubr.bf16.gmra.mxu0 %v1365
    %v1401 = vpop.f32.mrf.mxu0
    %v1402 = vadd.f32 0.0, %v1401
    %v1403 = vpop.f32.mrf.mxu0
    %v1404 = vadd.f32 0.0, %v1403
    %v1405 = vpop.f32.mrf.mxu0
    %v1406 = vpop.f32.mrf.mxu0
    %1407 = vdwg.mxu0
    %v1410 = vrot.slane %v1402, 4
    %v1411 = vrot.slane %v1404, 4
    %v1414 = vadd.f32 %v1140, %v1410
    %v1415 = vadd.f32 %v1141, %v1411
    %v1416 = vxor.u32 %v1414, 2147483648
    %v1417 = vxor.u32 %v1415, 2147483648
    %v1418 = vmul.f32 %v1416, 1.442695
    %v1419 = vpow.pop %v1418
    %v1420 = vmul.f32 %v1417, 1.442695
    %v1421 = vpow.pop %v1420
    %v1422 = vadd.f32 %v1419, 1.0
    %v1423 = vadd.f32 %v1421, 1.0
    %v1424 = vrcp.pop %v1422
    %v1425 = vmul.f32 1.0, %v1424
    %v1426 = vrcp.pop %v1423
    %v1427 = vmul.f32 1.0, %v1426
    %v1428 = vtanh.pop %v1415
    %v1430 = vrot.slane %v1354, 6
    %v1432 = vmul.f32 %v1425, %v1430
    %1434 = vrot.lane.b32.xlu0 %v1428, 64
    %v1435 = vpop.permute.xlu0 %1434
    %v1437 = vmul.f32 %v1425, %v1435
    %1439 = vrot.lane.b32.xlu0 %v1437, 64
    %v1440 = vpop.permute.xlu0 %1439
    %v1442 = vadd.f32 %v1432, %v1440
    %v1443 = vtanh.pop %v1442
    %1445 = vrot.lane.b32.xlu0 %v1443, 64
    %v1446 = vpop.permute.xlu0 %1445
    %v1448 = vmul.f32 %v1427, %v1446
    %v1449 = vpack.c.bf16 %v1448, %v1448
    %v1451 = vrot.slane %v1449, 2
    %v1453 = vsel %vm278, %v1451, 0
    %1455 = vmatprep.subr.bf16.mxu0 0
    %1456 = vmatpush1.bf16.msra.mxu0 0
    %1457 = vmatprep.subr.bf16.mxu0 0
    %1458 = vmatpush1.bf16.msra.mxu0 0
    %1459 = vmatprep.subr.bf16.mxu0 0
    %1460 = vmatpush1.bf16.msra.mxu0 0
    %1461 = vmatprep.subr.bf16.mxu0 0
    %1462 = vmatpush1.bf16.msra.mxu0 0
    %1463 = vmatprep.subr.bf16.mxu0 %v1193
    %1464 = vmatpush1.bf16.msra.mxu0 %v1192
    %1465 = vmatprep.subr.bf16.mxu0 %v1191
    %1466 = vmatpush1.bf16.msra.mxu0 %v1190
    %1467 = vmatprep.subr.bf16.mxu0 %v1189
    %1468 = vmatpush1.bf16.msra.mxu0 %v1188
    %1469 = vmatprep.subr.bf16.mxu0 %v1187
    %1470 = vmatpush1.bf16.msra.mxu0 %v1186
    %1471 = vmatprep.subr.bf16.mxu0 0
    %1472 = vmatpush2.bf16.msra.mxu0 0
    %1473 = vmatprep.subr.bf16.mxu0 0
    %1474 = vmatpush2.bf16.msra.mxu0 0
    %1475 = vmatprep.subr.bf16.mxu0 0
    %1476 = vmatpush2.bf16.msra.mxu0 0
    %1477 = vmatprep.subr.bf16.mxu0 0
    %1478 = vmatpush2.bf16.msra.mxu0 0
    %1479 = vmatprep.subr.bf16.mxu0 0
    %1480 = vmatpush2.bf16.msra.mxu0 0
    %1481 = vmatprep.subr.bf16.mxu0 0
    %1482 = vmatpush2.bf16.msra.mxu0 0
    %1483 = vmatprep.subr.bf16.mxu0 0
    %1484 = vmatpush2.bf16.msra.mxu0 0
    %1485 = vmatprep.subr.bf16.mxu0 0
    %1486 = vmatpush2.bf16.msra.mxu0 0
    %1487 = vmatprep.mubr.bf16.mxu0 0
    %1488 = vmatmul.mubr.bf16.gmra.mxu0 %v1453
    %v1489 = vpop.f32.mrf.mxu0
    %v1490 = vadd.f32 0.0, %v1489
    %v1491 = vpop.f32.mrf.mxu0
    %v1492 = vadd.f32 0.0, %v1491
    %v1493 = vpop.f32.mrf.mxu0
    %v1494 = vpop.f32.mrf.mxu0
    %1495 = vdwg.mxu0
    %v1498 = vrot.slane %v1490, 2
    %v1499 = vrot.slane %v1492, 2
    %v1502 = vadd.f32 %v1146, %v1498
    %v1503 = vadd.f32 %v1147, %v1499
    %v1504 = vxor.u32 %v1502, 2147483648
    %v1505 = vxor.u32 %v1503, 2147483648
    %v1506 = vmul.f32 %v1504, 1.442695
    %v1507 = vpow.pop %v1506
    %v1508 = vmul.f32 %v1505, 1.442695
    %v1509 = vpow.pop %v1508
    %v1510 = vadd.f32 %v1507, 1.0
    %v1511 = vadd.f32 %v1509, 1.0
    %v1512 = vrcp.pop %v1510
    %v1513 = vmul.f32 1.0, %v1512
    %v1514 = vrcp.pop %v1511
    %v1515 = vmul.f32 1.0, %v1514
    %v1516 = vtanh.pop %v1503
    %v1518 = vrot.slane %v1442, 6
    %v1520 = vmul.f32 %v1513, %v1518
    %1522 = vrot.lane.b32.xlu0 %v1516, 64
    %v1523 = vpop.permute.xlu0 %1522
    %v1525 = vmul.f32 %v1513, %v1523
    %1527 = vrot.lane.b32.xlu0 %v1525, 64
    %v1528 = vpop.permute.xlu0 %1527
    %v1530 = vadd.f32 %v1520, %v1528
    %v1531 = vtanh.pop %v1530
    %1533 = vrot.lane.b32.xlu0 %v1531, 64
    %v1534 = vpop.permute.xlu0 %1533
    %v1536 = vmul.f32 %v1515, %v1534
    %v1537 = vpack.c.bf16 %v1536, %v1536
    %v1539 = vrot.slane %v1537, 3
    %v1541 = vsel %vm278, %v1539, 0
    %1543 = vmatprep.subr.bf16.mxu0 0
    %1544 = vmatpush1.bf16.msra.mxu0 0
    %1545 = vmatprep.subr.bf16.mxu0 0
    %1546 = vmatpush1.bf16.msra.mxu0 0
    %1547 = vmatprep.subr.bf16.mxu0 0
    %1548 = vmatpush1.bf16.msra.mxu0 0
    %1549 = vmatprep.subr.bf16.mxu0 0
    %1550 = vmatpush1.bf16.msra.mxu0 0
    %1551 = vmatprep.subr.bf16.mxu0 %v1193
    %1552 = vmatpush1.bf16.msra.mxu0 %v1192
    %1553 = vmatprep.subr.bf16.mxu0 %v1191
    %1554 = vmatpush1.bf16.msra.mxu0 %v1190
    %1555 = vmatprep.subr.bf16.mxu0 %v1189
    %1556 = vmatpush1.bf16.msra.mxu0 %v1188
    %1557 = vmatprep.subr.bf16.mxu0 %v1187
    %1558 = vmatpush1.bf16.msra.mxu0 %v1186
    %1559 = vmatprep.subr.bf16.mxu0 0
    %1560 = vmatpush2.bf16.msra.mxu0 0
    %1561 = vmatprep.subr.bf16.mxu0 0
    %1562 = vmatpush2.bf16.msra.mxu0 0
    %1563 = vmatprep.subr.bf16.mxu0 0
    %1564 = vmatpush2.bf16.msra.mxu0 0
    %1565 = vmatprep.subr.bf16.mxu0 0
    %1566 = vmatpush2.bf16.msra.mxu0 0
    %1567 = vmatprep.subr.bf16.mxu0 0
    %1568 = vmatpush2.bf16.msra.mxu0 0
    %1569 = vmatprep.subr.bf16.mxu0 0
    %1570 = vmatpush2.bf16.msra.mxu0 0
    %1571 = vmatprep.subr.bf16.mxu0 0
    %1572 = vmatpush2.bf16.msra.mxu0 0
    %1573 = vmatprep.subr.bf16.mxu0 0
    %1574 = vmatpush2.bf16.msra.mxu0 0
    %1575 = vmatprep.mubr.bf16.mxu0 0
    %1576 = vmatmul.mubr.bf16.gmra.mxu0 %v1541
    %v1577 = vpop.f32.mrf.mxu0
    %v1578 = vadd.f32 0.0, %v1577
    %v1579 = vpop.f32.mrf.mxu0
    %v1580 = vadd.f32 0.0, %v1579
    %v1581 = vpop.f32.mrf.mxu0
    %v1582 = vpop.f32.mrf.mxu0
    %1583 = vdwg.mxu0
    %v1584 = vadd.f32 %v1154, %v1578
    %v1585 = vadd.f32 %v1155, %v1580
    %v1586 = vxor.u32 %v1584, 2147483648
    %v1587 = vxor.u32 %v1585, 2147483648
    %v1588 = vmul.f32 %v1586, 1.442695
    %v1589 = vpow.pop %v1588
    %v1590 = vmul.f32 %v1587, 1.442695
    %v1591 = vpow.pop %v1590
    %v1592 = vadd.f32 %v1589, 1.0
    %v1593 = vadd.f32 %v1591, 1.0
    %v1594 = vrcp.pop %v1592
    %v1595 = vmul.f32 1.0, %v1594
    %v1596 = vrcp.pop %v1593
    %v1597 = vmul.f32 1.0, %v1596
    %v1598 = vtanh.pop %v1585
    %v1600 = vrot.slane %v1530, 6
    %v1602 = vmul.f32 %v1595, %v1600
    %1604 = vrot.lane.b32.xlu0 %v1598, 64
    %v1605 = vpop.permute.xlu0 %1604
    %v1607 = vmul.f32 %v1595, %v1605
    %1609 = vrot.lane.b32.xlu0 %v1607, 64
    %v1610 = vpop.permute.xlu0 %1609
    %v1612 = vadd.f32 %v1602, %v1610
    %v1613 = vtanh.pop %v1612
    %1615 = vrot.lane.b32.xlu0 %v1613, 64
    %v1616 = vpop.permute.xlu0 %1615
    %v1618 = vmul.f32 %v1597, %v1616
    %v1619 = vpack.c.bf16 %v1618, %v1618
    %v1621 = vsel %vm278, %v1619, 0
    %1623 = vmatprep.subr.bf16.mxu0 0
    %1624 = vmatpush1.bf16.msra.mxu0 0
    %1625 = vmatprep.subr.bf16.mxu0 0
    %1626 = vmatpush1.bf16.msra.mxu0 0
    %1627 = vmatprep.subr.bf16.mxu0 0
    %1628 = vmatpush1.bf16.msra.mxu0 0
    %1629 = vmatprep.subr.bf16.mxu0 0
    %1630 = vmatpush1.bf16.msra.mxu0 0
    %1631 = vmatprep.subr.bf16.mxu0 %v1193
    %1632 = vmatpush1.bf16.msra.mxu0 %v1192
    %1633 = vmatprep.subr.bf16.mxu0 %v1191
    %1634 = vmatpush1.bf16.msra.mxu0 %v1190
    %1635 = vmatprep.subr.bf16.mxu0 %v1189
    %1636 = vmatpush1.bf16.msra.mxu0 %v1188
    %1637 = vmatprep.subr.bf16.mxu0 %v1187
    %1638 = vmatpush1.bf16.msra.mxu0 %v1186
    %1639 = vmatprep.subr.bf16.mxu0 0
    %1640 = vmatpush2.bf16.msra.mxu0 0
    %1641 = vmatprep.subr.bf16.mxu0 0
    %1642 = vmatpush2.bf16.msra.mxu0 0
    %1643 = vmatprep.subr.bf16.mxu0 0
    %1644 = vmatpush2.bf16.msra.mxu0 0
    %1645 = vmatprep.subr.bf16.mxu0 0
    %1646 = vmatpush2.bf16.msra.mxu0 0
    %1647 = vmatprep.subr.bf16.mxu0 0
    %1648 = vmatpush2.bf16.msra.mxu0 0
    %1649 = vmatprep.subr.bf16.mxu0 0
    %1650 = vmatpush2.bf16.msra.mxu0 0
    %1651 = vmatprep.subr.bf16.mxu0 0
    %1652 = vmatpush2.bf16.msra.mxu0 0
    %1653 = vmatprep.subr.bf16.mxu0 0
    %1654 = vmatpush2.bf16.msra.mxu0 0
    %1655 = vmatprep.mubr.bf16.mxu0 0
    %1656 = vmatmul.mubr.bf16.gmra.mxu0 %v1621
    %v1657 = vpop.f32.mrf.mxu0
    %v1658 = vadd.f32 0.0, %v1657
    %v1659 = vpop.f32.mrf.mxu0
    %v1660 = vadd.f32 0.0, %v1659
    %v1661 = vpop.f32.mrf.mxu0
    %v1662 = vpop.f32.mrf.mxu0
    %1663 = vdwg.mxu0
    %v1666 = vrot.slane %v1658, 6
    %v1667 = vrot.slane %v1660, 6
    %v1670 = vadd.f32 %v1160, %v1666
    %v1671 = vadd.f32 %v1161, %v1667
    %v1672 = vxor.u32 %v1670, 2147483648
    %v1673 = vxor.u32 %v1671, 2147483648
    %v1674 = vmul.f32 %v1672, 1.442695
    %v1675 = vpow.pop %v1674
    %v1676 = vmul.f32 %v1673, 1.442695
    %v1677 = vpow.pop %v1676
    %v1678 = vadd.f32 %v1675, 1.0
    %v1679 = vadd.f32 %v1677, 1.0
    %v1680 = vrcp.pop %v1678
    %v1681 = vmul.f32 1.0, %v1680
    %v1682 = vrcp.pop %v1679
    %v1683 = vmul.f32 1.0, %v1682
    %v1684 = vtanh.pop %v1671
    %v1686 = vrot.slane %v1612, 6
    %v1688 = vmul.f32 %v1681, %v1686
    %1690 = vrot.lane.b32.xlu0 %v1684, 64
    %v1691 = vpop.permute.xlu0 %1690
    %v1693 = vmul.f32 %v1681, %v1691
    %1695 = vrot.lane.b32.xlu0 %v1693, 64
    %v1696 = vpop.permute.xlu0 %1695
    %v1698 = vadd.f32 %v1688, %v1696
    %v1699 = vtanh.pop %v1698
    %1701 = vrot.lane.b32.xlu0 %v1699, 64
    %v1702 = vpop.permute.xlu0 %1701
    %v1704 = vmul.f32 %v1683, %v1702
    %v1705 = vpack.c.bf16 %v1704, %v1704
    %v1707 = vrot.slane %v1705, 1
    %v1709 = vsel %vm278, %v1707, 0
    %1711 = vmatprep.subr.bf16.mxu0 0
    %1712 = vmatpush1.bf16.msra.mxu0 0
    %1713 = vmatprep.subr.bf16.mxu0 0
    %1714 = vmatpush1.bf16.msra.mxu0 0
    %1715 = vmatprep.subr.bf16.mxu0 0
    %1716 = vmatpush1.bf16.msra.mxu0 0
    %1717 = vmatprep.subr.bf16.mxu0 0
    %1718 = vmatpush1.bf16.msra.mxu0 0
    %1719 = vmatprep.subr.bf16.mxu0 %v1193
    %1720 = vmatpush1.bf16.msra.mxu0 %v1192
    %1721 = vmatprep.subr.bf16.mxu0 %v1191
    %1722 = vmatpush1.bf16.msra.mxu0 %v1190
    %1723 = vmatprep.subr.bf16.mxu0 %v1189
    %1724 = vmatpush1.bf16.msra.mxu0 %v1188
    %1725 = vmatprep.subr.bf16.mxu0 %v1187
    %1726 = vmatpush1.bf16.msra.mxu0 %v1186
    %1727 = vmatprep.subr.bf16.mxu0 0
    %1728 = vmatpush2.bf16.msra.mxu0 0
    %1729 = vmatprep.subr.bf16.mxu0 0
    %1730 = vmatpush2.bf16.msra.mxu0 0
    %1731 = vmatprep.subr.bf16.mxu0 0
    %1732 = vmatpush2.bf16.msra.mxu0 0
    %1733 = vmatprep.subr.bf16.mxu0 0
    %1734 = vmatpush2.bf16.msra.mxu0 0
    %1735 = vmatprep.subr.bf16.mxu0 0
    %1736 = vmatpush2.bf16.msra.mxu0 0
    %1737 = vmatprep.subr.bf16.mxu0 0
    %1738 = vmatpush2.bf16.msra.mxu0 0
    %1739 = vmatprep.subr.bf16.mxu0 0
    %1740 = vmatpush2.bf16.msra.mxu0 0
    %1741 = vmatprep.subr.bf16.mxu0 0
    %1742 = vmatpush2.bf16.msra.mxu0 0
    %1743 = vmatprep.mubr.bf16.mxu0 0
    %1744 = vmatmul.mubr.bf16.gmra.mxu0 %v1709
    %v1745 = vpop.f32.mrf.mxu0
    %v1746 = vadd.f32 0.0, %v1745
    %v1747 = vpop.f32.mrf.mxu0
    %v1748 = vadd.f32 0.0, %v1747
    %v1749 = vpop.f32.mrf.mxu0
    %v1750 = vpop.f32.mrf.mxu0
    %1751 = vdwg.mxu0
    %v1754 = vrot.slane %v1746, 4
    %v1755 = vrot.slane %v1748, 4
    %v1758 = vadd.f32 %v1154, %v1754
    %v1759 = vadd.f32 %v1155, %v1755
    %v1760 = vxor.u32 %v1758, 2147483648
    %v1761 = vxor.u32 %v1759, 2147483648
    %v1762 = vmul.f32 %v1760, 1.442695
    %v1763 = vpow.pop %v1762
    %v1764 = vmul.f32 %v1761, 1.442695
    %v1765 = vpow.pop %v1764
    %v1766 = vadd.f32 %v1763, 1.0
    %v1767 = vadd.f32 %v1765, 1.0
    %v1768 = vrcp.pop %v1766
    %v1769 = vmul.f32 1.0, %v1768
    %v1770 = vrcp.pop %v1767
    %v1771 = vmul.f32 1.0, %v1770
    %v1772 = vtanh.pop %v1759
    %v1774 = vrot.slane %v1698, 6
    %v1776 = vmul.f32 %v1769, %v1774
    %1778 = vrot.lane.b32.xlu0 %v1772, 64
    %v1779 = vpop.permute.xlu0 %1778
    %v1781 = vmul.f32 %v1769, %v1779
    %1783 = vrot.lane.b32.xlu0 %v1781, 64
    %v1784 = vpop.permute.xlu0 %1783
    %v1786 = vadd.f32 %v1776, %v1784
    %v1787 = vtanh.pop %v1786
    %1789 = vrot.lane.b32.xlu0 %v1787, 64
    %v1790 = vpop.permute.xlu0 %1789
    %v1792 = vmul.f32 %v1771, %v1790
    %v1793 = vpack.c.bf16 %v1792, %v1792
    %v1795 = vrot.slane %v1793, 2
    %v1797 = vsel %vm278, %v1795, 0
    %1799 = vmatprep.subr.bf16.mxu0 0
    %1800 = vmatpush1.bf16.msra.mxu0 0
    %1801 = vmatprep.subr.bf16.mxu0 0
    %1802 = vmatpush1.bf16.msra.mxu0 0
    %1803 = vmatprep.subr.bf16.mxu0 0
    %1804 = vmatpush1.bf16.msra.mxu0 0
    %1805 = vmatprep.subr.bf16.mxu0 0
    %1806 = vmatpush1.bf16.msra.mxu0 0
    %1807 = vmatprep.subr.bf16.mxu0 %v1193
    %1808 = vmatpush1.bf16.msra.mxu0 %v1192
    %1809 = vmatprep.subr.bf16.mxu0 %v1191
    %1810 = vmatpush1.bf16.msra.mxu0 %v1190
    %1811 = vmatprep.subr.bf16.mxu0 %v1189
    %1812 = vmatpush1.bf16.msra.mxu0 %v1188
    %1813 = vmatprep.subr.bf16.mxu0 %v1187
    %1814 = vmatpush1.bf16.msra.mxu0 %v1186
    %1815 = vmatprep.subr.bf16.mxu0 0
    %1816 = vmatpush2.bf16.msra.mxu0 0
    %1817 = vmatprep.subr.bf16.mxu0 0
    %1818 = vmatpush2.bf16.msra.mxu0 0
    %1819 = vmatprep.subr.bf16.mxu0 0
    %1820 = vmatpush2.bf16.msra.mxu0 0
    %1821 = vmatprep.subr.bf16.mxu0 0
    %1822 = vmatpush2.bf16.msra.mxu0 0
    %1823 = vmatprep.subr.bf16.mxu0 0
    %1824 = vmatpush2.bf16.msra.mxu0 0
    %1825 = vmatprep.subr.bf16.mxu0 0
    %1826 = vmatpush2.bf16.msra.mxu0 0
    %1827 = vmatprep.subr.bf16.mxu0 0
    %1828 = vmatpush2.bf16.msra.mxu0 0
    %1829 = vmatprep.subr.bf16.mxu0 0
    %1830 = vmatpush2.bf16.msra.mxu0 0
    %1831 = vmatprep.mubr.bf16.mxu0 0
    %1832 = vmatmul.mubr.bf16.gmra.mxu0 %v1797
    %v1833 = vpop.f32.mrf.mxu0
    %v1834 = vadd.f32 0.0, %v1833
    %v1835 = vpop.f32.mrf.mxu0
    %v1836 = vadd.f32 0.0, %v1835
    %v1837 = vpop.f32.mrf.mxu0
    %v1838 = vpop.f32.mrf.mxu0
    %1839 = vdwg.mxu0
    %v1842 = vrot.slane %v1834, 2
    %v1843 = vrot.slane %v1836, 2
    %v1846 = vadd.f32 %v1160, %v1842
    %v1847 = vadd.f32 %v1161, %v1843
    %v1848 = vxor.u32 %v1846, 2147483648
    %v1849 = vxor.u32 %v1847, 2147483648
    %v1850 = vmul.f32 %v1848, 1.442695
    %v1851 = vpow.pop %v1850
    %v1852 = vmul.f32 %v1849, 1.442695
    %v1853 = vpow.pop %v1852
    %v1854 = vadd.f32 %v1851, 1.0
    %v1855 = vadd.f32 %v1853, 1.0
    %v1856 = vrcp.pop %v1854
    %v1857 = vmul.f32 1.0, %v1856
    %v1858 = vrcp.pop %v1855
    %v1859 = vmul.f32 1.0, %v1858
    %v1860 = vtanh.pop %v1847
    %v1862 = vrot.slane %v1786, 6
    %v1864 = vmul.f32 %v1857, %v1862
    %1866 = vrot.lane.b32.xlu0 %v1860, 64
    %v1867 = vpop.permute.xlu0 %1866
    %v1869 = vmul.f32 %v1857, %v1867
    %1871 = vrot.lane.b32.xlu0 %v1869, 64
    %v1872 = vpop.permute.xlu0 %1871
    %v1874 = vadd.f32 %v1864, %v1872
    %v1875 = vtanh.pop %v1874
    %1877 = vrot.lane.b32.xlu0 %v1875, 64
    %v1878 = vpop.permute.xlu0 %1877
    %v1880 = vmul.f32 %v1859, %v1878
    %s1881 = scalar_lea.vmem [#allocation10], 4
    %1882 = vst.msk [vmem:[%s1881 - $0x6] sm:$0xc0] %vm961, %v1880
    %1884 = vrot.lane.b32.xlu0 %v1880, 96
    %v1885 = vpop.permute.xlu0 %1884
    %s1887 = scalar_lea.vmem [#allocation10], 6
    %1888 = vst.msk [vmem:[%s1887 - $0x6] sm:$0xc0] %vm961, %v1885
    %1890 = vrot.lane.b32.xlu0 %v1874, 64
    %v1891 = vpop.permute.xlu0 %1890
    %s1893 = scalar_lea.vmem [#allocation11], 4
    %1894 = vst.msk [vmem:[%s1893 - $0x6] sm:$0xc0] %vm961, %v1891
    %1895 = vrot.lane.b32.xlu0 %v1874, 32
    %v1896 = vpop.permute.xlu0 %1895
    %s1898 = scalar_lea.vmem [#allocation11], 6
    %1899 = vst.msk [vmem:[%s1898 - $0x6] sm:$0xc0] %vm961, %v1896
    // Predicated region
    $region46: #{encoder_forward.1} parent=1 // pred_check
      _
    $region47: #{encoder_forward.1} parent=1 // pred_check_branch
      %1901 = sbr.rel (0) target = $region49
    $region48: #{encoder_forward.1} parent=1 // pred_region
      %s1903 = ssub.s32 128, 128
      %1904 = vsyncadd [#allocation4], %s1903
      %s1905 = sshll.u32 [#allocation10], 4
      %s1906 = int_to_ptr.vmem [resolvable:$true] %s1905
      %1911 = dma.vmem_to_hbm [thread:$0]  %s1906, 128, %s7, [#allocation4], 32, 32, 2
    $region49: #{encoder_forward.1} parent=1 // pred_fallthru
      _
    // Predicated region
    $region50: #{encoder_forward.1} parent=1 // pred_check
      _
    $region51: #{encoder_forward.1} parent=1 // pred_check_branch
      %1913 = sbr.rel (0) target = $region53
    $region52: #{encoder_forward.1} parent=1 // pred_region
      %s1915 = ssub.s32 128, 128
      %1916 = vsyncadd [#allocation12], %s1915
      %s1917 = sshll.u32 [#allocation11], 4
      %s1918 = int_to_ptr.vmem [resolvable:$true] %s1917
      %1923 = dma.vmem_to_hbm [thread:$0]  %s1918, 128, %s8, [#allocation12], 32, 32, 2
    $region53: #{encoder_forward.1} parent=1 // pred_fallthru
      _
    // Predicated region
    $region54: #{encoder_forward.1} parent=1 // pred_check
      _
    $region55: #{encoder_forward.1} parent=1 // pred_check_branch
      %1925 = sbr.rel (0) target = $region57
    $region56: #{encoder_forward.1} parent=1 // pred_region
      %1926 = dma.done [#allocation4], 128
    $region57: #{encoder_forward.1} parent=1 // pred_fallthru
      _
    // Predicated region
    $region58: #{encoder_forward.1} parent=1 // pred_check
      _
    $region59: #{encoder_forward.1} parent=1 // pred_check_branch
      %1928 = sbr.rel (0) target = $region61
    $region60: #{encoder_forward.1} parent=1 // pred_region
      %1929 = dma.done [#allocation12], 128
    $region61: #{encoder_forward.1} parent=1 // pred_fallthru
      _
    %1930 = vsyncpa [#allocation3], 1
    %1931 = vsyncpa [#allocation6], 1
    %1932 = vsyncpa [#allocation9], 1
    %1933 = vsyncpa [#allocation4], 1
    %1934 = vsyncpa [#allocation12], 1

</llo_original>
